<compile_context>
chip_gen: v6e
topology: v6e:2x2x1
jax: 0.10.0
libtpu: 0.0.40
codegen_flags: <defaults>
</compile_context>

<pallas_src>
import jax
import jax.numpy as jnp
from jax import lax
from jax.experimental import pallas as pl
from jax.experimental.pallas import tpu as pltpu
import numpy as np

INPUT_DIM = 24
HIDDEN = 128
LN_EPS = 1e-5


def simple_lstm_kernel(x_ref, gamma_ref, beta_ref,
                       wih_ref, whh_ref, b_ref,
                       w1_ref, b1_ref, w2_ref, b2_ref, w3_ref, b3_ref,
                       out_ref, gx_ref):
    TB, D = x_ref.shape           # x is time-major flat: row index = t * B + b
    B = out_ref.shape[0]
    T = TB // B
    H = whh_ref.shape[0]

    # ---- hoisted x-path: LayerNorm + x @ W_ih + bias for ALL timesteps ----
    x = x_ref[...]                                             # (T*B, D)
    mu = jnp.mean(x, axis=-1, keepdims=True)
    var = jnp.mean((x - mu) * (x - mu), axis=-1, keepdims=True)
    xn = (x - mu) * lax.rsqrt(var + LN_EPS) * gamma_ref[...] + beta_ref[...]
    gx_ref[...] = (jnp.dot(xn, wih_ref[...],
                           preferred_element_type=jnp.float32) + b_ref[...])

    # ---- serial recurrence: only h @ W_hh + gates + cell update per step ----
    def step(t, carry):
        h, c = carry
        gx = gx_ref[pl.ds(t * B, B), :]                        # (B, 4H)
        # Read W_hh from VMEM each iteration (do not pin 64 vregs live).
        gates = gx + jnp.dot(h, whh_ref[...],
                             preferred_element_type=jnp.float32)
        # PyTorch gate order: i, f, g, o (slices land on 128-lane boundaries).
        i_g = jax.nn.sigmoid(gates[:, 0 * H:1 * H])
        f_g = jax.nn.sigmoid(gates[:, 1 * H:2 * H])
        g_g = jnp.tanh(gates[:, 2 * H:3 * H])
        o_g = jax.nn.sigmoid(gates[:, 3 * H:4 * H])
        c_new = f_g * c + i_g * g_g
        h_new = o_g * jnp.tanh(c_new)
        return (h_new, c_new)

    h0 = jnp.zeros((B, H), jnp.float32)
    c0 = jnp.zeros((B, H), jnp.float32)
    h, _ = lax.fori_loop(0, T, step, (h0, c0), unroll=True)

    # ---- MLP head on the last hidden state (dropouts identity in eval) ----
    z = jnp.maximum(jnp.dot(h, w1_ref[...],
                            preferred_element_type=jnp.float32) + b1_ref[...], 0.0)
    z = jnp.maximum(jnp.dot(z, w2_ref[...],
                            preferred_element_type=jnp.float32) + b2_ref[...], 0.0)
    out_ref[...] = (jnp.dot(z, w3_ref[...],
                            preferred_element_type=jnp.float32) + b3_ref[...])


def simple_lstm_forward(x, params):
    """x: (B, T, D) float32 (batch_first, like the PyTorch module)."""
    B, T, D = x.shape
    H = params["w_hh"].shape[0]
    # Time-major flatten so the kernel can (a) run LN + x@W_ih for all steps as
    # a single matmul and (b) slice each step's B rows contiguously with
    # pl.ds(t*B, B).  The transpose is a ~1.5 KB XLA-side copy — negligible.
    x_flat = jnp.transpose(x, (1, 0, 2)).reshape(T * B, D)

    args = (
        x_flat,
        params["ln_gamma"], params["ln_beta"],
        params["w_ih"], params["w_hh"], params["b_lstm"],
        params["w1"], params["b1"],
        params["w2"], params["b2"],
        params["w3"], params["b3"],
    )
    vmem = pl.BlockSpec(memory_space=pltpu.MemorySpace.VMEM)
    return pl.pallas_call(
        simple_lstm_kernel,
        out_shape=jax.ShapeDtypeStruct((B, 2), jnp.float32),
        in_specs=[vmem] * len(args),
        out_specs=vmem,
        scratch_shapes=[pltpu.VMEM((T * B, 4 * H), jnp.float32)],
    )(*args)


def make_params(key, input_dim=INPUT_DIM, hidden=HIDDEN):
    ks = jax.random.split(key, 10)

    def u(k, shape, bound):
        return jax.random.uniform(k, shape, jnp.float32, -bound, bound)

    bl = 1.0 / np.sqrt(hidden)
    # PyTorch layouts: weight_ih (4H, D), weight_hh (4H, H); store transposed.
    w_ih = u(ks[0], (4 * hidden, input_dim), bl).T            # (D, 4H)
    w_hh = u(ks[1], (4 * hidden, hidden), bl).T               # (H, 4H)
    b_ih = u(ks[2], (4 * hidden,), bl)
    b_hh = u(ks[3], (4 * hidden,), bl)

    b1f = 1.0 / np.sqrt(hidden)
    b2f = 1.0 / np.sqrt(hidden)
    b3f = 1.0 / np.sqrt(hidden // 2)
    w1 = u(ks[4], (hidden, hidden), b1f).T                    # (H, H)
    b1 = u(ks[5], (hidden,), b1f)
    w2 = u(ks[6], (hidden // 2, hidden), b2f).T               # (H, H/2)
    b2 = u(ks[7], (hidden // 2,), b2f)
    w3 = u(ks[8], (2, hidden // 2), b3f).T                    # (H/2, 2)
    b3 = u(ks[9], (2,), b3f)

    return {
        "ln_gamma": jnp.ones((1, input_dim), jnp.float32),
        "ln_beta": jnp.zeros((1, input_dim), jnp.float32),
        "w_ih": jnp.asarray(w_ih), "w_hh": jnp.asarray(w_hh),
        "b_lstm": (b_ih + b_hh).reshape(1, 4 * hidden),
        "w1": jnp.asarray(w1), "b1": b1.reshape(1, hidden),
        "w2": jnp.asarray(w2), "b2": b2.reshape(1, hidden // 2),
        "w3": jnp.asarray(w3), "b3": b3.reshape(1, 2),
    }


def reference_forward(x, p):
    """Pure-JAX reference mirroring the PyTorch module (eval mode)."""
    B, T, D = x.shape
    H = HIDDEN
    mu = jnp.mean(x, -1, keepdims=True)
    var = jnp.mean((x - mu) ** 2, -1, keepdims=True)
    xn = (x - mu) / jnp.sqrt(var + LN_EPS) * p["ln_gamma"] + p["ln_beta"]

    def cell(carry, xt):
        h, c = carry
        g = xt @ p["w_ih"] + h @ p["w_hh"] + p["b_lstm"]
        i = jax.nn.sigmoid(g[:, :H]); f = jax.nn.sigmoid(g[:, H:2 * H])
        gg = jnp.tanh(g[:, 2 * H:3 * H]); o = jax.nn.sigmoid(g[:, 3 * H:])
        c = f * c + i * gg
        h = o * jnp.tanh(c)
        return (h, c), None

    (h, _), _ = lax.scan(cell, (jnp.zeros((B, H)), jnp.zeros((B, H))),
                         jnp.transpose(xn, (1, 0, 2)))
    z = jax.nn.relu(h @ p["w1"] + p["b1"])
    z = jax.nn.relu(z @ p["w2"] + p["b2"])
    return z @ p["w3"] + p["b3"]


if __name__ == "__main__":
    key = jax.random.PRNGKey(0)
    k_x, k_p = jax.random.split(key)

    B, T, D = 2, 8, INPUT_DIM
    x = jax.random.normal(k_x, (B, T, D), jnp.float32)
    params = make_params(k_p)

    out = simple_lstm_forward(x, params)
    out = jax.block_until_ready(out)

    ref = reference_forward(x, params)
    np.testing.assert_allclose(np.asarray(out), np.asarray(ref),
                               rtol=1e-4, atol=1e-4)
    print("KERNEL_OK")
</pallas_src>

<mosaic_0001>
module attributes {stable_mosaic.version = 11 : i64} {
  func.func @simple_lstm_kernel(%arg0: memref<16x24xf32, #tpu.memory_space<vmem>>, %arg1: memref<1x24xf32, #tpu.memory_space<vmem>>, %arg2: memref<1x24xf32, #tpu.memory_space<vmem>>, %arg3: memref<24x512xf32, #tpu.memory_space<vmem>>, %arg4: memref<128x512xf32, #tpu.memory_space<vmem>>, %arg5: memref<1x512xf32, #tpu.memory_space<vmem>>, %arg6: memref<128x128xf32, #tpu.memory_space<vmem>>, %arg7: memref<1x128xf32, #tpu.memory_space<vmem>>, %arg8: memref<128x64xf32, #tpu.memory_space<vmem>>, %arg9: memref<1x64xf32, #tpu.memory_space<vmem>>, %arg10: memref<64x2xf32, #tpu.memory_space<vmem>>, %arg11: memref<1x2xf32, #tpu.memory_space<vmem>>, %arg12: memref<2x2xf32, #tpu.memory_space<vmem>>, %arg13: memref<16x512xf32, #tpu.memory_space<vmem>>) attributes {dimension_semantics = [], scalar_prefetch = 0 : i64, scratch_operands = 1 : i64, tpu.core_type = #tpu.core_type<tc>} {
    %c0 = arith.constant 0 : index
    %c0_0 = arith.constant 0 : index
    %0 = vector.load %arg0[%c0, %c0_0] : memref<16x24xf32, #tpu.memory_space<vmem>>, vector<16x24xf32>
    %cst = arith.constant dense<0.000000e+00> : vector<16xf32>
    %1 = vector.multi_reduction <add>, %0, %cst [1] : vector<16x24xf32> to vector<16xf32>
    %2 = vector.shape_cast %1 : vector<16xf32> to vector<16x1xf32>
    %cst_1 = arith.constant 2.400000e+01 : f32
    %3 = vector.broadcast %cst_1 : f32 to vector<16x1xf32>
    %4 = arith.divf %2, %3 : vector<16x1xf32>
    %5 = vector.broadcast %4 : vector<16x1xf32> to vector<16x24xf32>
    %6 = arith.subf %0, %5 : vector<16x24xf32>
    %7 = vector.broadcast %4 : vector<16x1xf32> to vector<16x24xf32>
    %8 = arith.subf %0, %7 : vector<16x24xf32>
    %9 = arith.mulf %6, %8 : vector<16x24xf32>
    %cst_2 = arith.constant dense<0.000000e+00> : vector<16xf32>
    %10 = vector.multi_reduction <add>, %9, %cst_2 [1] : vector<16x24xf32> to vector<16xf32>
    %11 = vector.shape_cast %10 : vector<16xf32> to vector<16x1xf32>
    %cst_3 = arith.constant 2.400000e+01 : f32
    %12 = vector.broadcast %cst_3 : f32 to vector<16x1xf32>
    %13 = arith.divf %11, %12 : vector<16x1xf32>
    %14 = vector.broadcast %4 : vector<16x1xf32> to vector<16x24xf32>
    %15 = arith.subf %0, %14 : vector<16x24xf32>
    %cst_4 = arith.constant 9.99999974E-6 : f32
    %16 = vector.broadcast %cst_4 : f32 to vector<16x1xf32>
    %17 = arith.addf %13, %16 : vector<16x1xf32>
    %18 = math.rsqrt %17 : vector<16x1xf32>
    %19 = vector.broadcast %18 : vector<16x1xf32> to vector<16x24xf32>
    %20 = arith.mulf %15, %19 : vector<16x24xf32>
    %c0_5 = arith.constant 0 : index
    %c0_6 = arith.constant 0 : index
    %21 = vector.load %arg1[%c0_5, %c0_6] : memref<1x24xf32, #tpu.memory_space<vmem>>, vector<1x24xf32>
    %22 = vector.broadcast %21 : vector<1x24xf32> to vector<16x24xf32>
    %23 = arith.mulf %20, %22 : vector<16x24xf32>
    %c0_7 = arith.constant 0 : index
    %c0_8 = arith.constant 0 : index
    %24 = vector.load %arg2[%c0_7, %c0_8] : memref<1x24xf32, #tpu.memory_space<vmem>>, vector<1x24xf32>
    %25 = vector.broadcast %24 : vector<1x24xf32> to vector<16x24xf32>
    %26 = arith.addf %23, %25 : vector<16x24xf32>
    %c0_9 = arith.constant 0 : index
    %c0_10 = arith.constant 0 : index
    %27 = vector.load %arg3[%c0_9, %c0_10] : memref<24x512xf32, #tpu.memory_space<vmem>>, vector<24x512xf32>
    %cst_11 = arith.constant dense<0.000000e+00> : vector<16x512xf32>
    %28 = tpu.matmul %26, %27, %cst_11 {dimension_numbers = #tpu.dot_dimension_numbers<[1], [0], [0], [1], [0, 0, 1, 1], [], []>} : vector<16x24xf32>, vector<24x512xf32>, vector<16x512xf32> -> vector<16x512xf32>
    %c0_12 = arith.constant 0 : index
    %c0_13 = arith.constant 0 : index
    %29 = vector.load %arg5[%c0_12, %c0_13] : memref<1x512xf32, #tpu.memory_space<vmem>>, vector<1x512xf32>
    %30 = vector.broadcast %29 : vector<1x512xf32> to vector<16x512xf32>
    %31 = arith.addf %28, %30 : vector<16x512xf32>
    %c0_14 = arith.constant 0 : index
    %c0_15 = arith.constant 0 : index
    %32 = vector.load %arg13[%c0_14, %c0_15] : memref<16x512xf32, #tpu.memory_space<vmem>>, vector<16x512xf32>
    tpu.vector_store %arg13[%c0_14, %c0_15], %31 {strides = array<i32>} : memref<16x512xf32, #tpu.memory_space<vmem>>, vector<16x512xf32>,
    %cst_16 = arith.constant 0.000000e+00 : f32
    %33 = vector.broadcast %cst_16 : f32 to vector<2x128xf32>
    %cst_17 = arith.constant 0.000000e+00 : f32
    %34 = vector.broadcast %cst_17 : f32 to vector<2x128xf32>
    %c0_i32 = arith.constant 0 : i32
    %c2_i32 = arith.constant 2 : i32
    %35 = arith.muli %c0_i32, %c2_i32 : i32
    %36 = arith.index_cast %35 : i32 to index
    %c0_18 = arith.constant 0 : index
    %37 = vector.load %arg13[%36, %c0_18] : memref<16x512xf32, #tpu.memory_space<vmem>>, vector<2x512xf32>
    %c0_19 = arith.constant 0 : index
    %c0_20 = arith.constant 0 : index
    %38 = vector.load %arg4[%c0_19, %c0_20] : memref<128x512xf32, #tpu.memory_space<vmem>>, vector<128x512xf32>
    %cst_21 = arith.constant dense<0.000000e+00> : vector<2x512xf32>
    %39 = tpu.matmul %33, %38, %cst_21 {dimension_numbers = #tpu.dot_dimension_numbers<[1], [0], [0], [1], [0, 0, 1, 1], [], []>} : vector<2x128xf32>, vector<128x512xf32>, vector<2x512xf32> -> vector<2x512xf32>
    %40 = arith.addf %37, %39 : vector<2x512xf32>
    %41 = vector.extract_strided_slice %40 {offsets = [0, 0], sizes = [2, 128], strides = [1, 1]} : vector<2x512xf32> to vector<2x128xf32>
    %42 = arith.negf %41 : vector<2x128xf32>
    %43 = math.exp %42 : vector<2x128xf32>
    %cst_22 = arith.constant 1.000000e+00 : f32
    %44 = vector.broadcast %cst_22 : f32 to vector<2x128xf32>
    %45 = arith.addf %44, %43 : vector<2x128xf32>
    %46 = arith.divf %44, %45 : vector<2x128xf32>
    %47 = vector.extract_strided_slice %40 {offsets = [0, 128], sizes = [2, 128], strides = [1, 1]} : vector<2x512xf32> to vector<2x128xf32>
    %48 = arith.negf %47 : vector<2x128xf32>
    %49 = math.exp %48 : vector<2x128xf32>
    %cst_23 = arith.constant 1.000000e+00 : f32
    %50 = vector.broadcast %cst_23 : f32 to vector<2x128xf32>
    %51 = arith.addf %50, %49 : vector<2x128xf32>
    %52 = arith.divf %50, %51 : vector<2x128xf32>
    %53 = vector.extract_strided_slice %40 {offsets = [0, 256], sizes = [2, 128], strides = [1, 1]} : vector<2x512xf32> to vector<2x128xf32>
    %54 = math.tanh %53 : vector<2x128xf32>
    %55 = vector.extract_strided_slice %40 {offsets = [0, 384], sizes = [2, 128], strides = [1, 1]} : vector<2x512xf32> to vector<2x128xf32>
    %56 = arith.negf %55 : vector<2x128xf32>
    %57 = math.exp %56 : vector<2x128xf32>
    %cst_24 = arith.constant 1.000000e+00 : f32
    %58 = vector.broadcast %cst_24 : f32 to vector<2x128xf32>
    %59 = arith.addf %58, %57 : vector<2x128xf32>
    %60 = arith.divf %58, %59 : vector<2x128xf32>
    %61 = arith.mulf %52, %34 : vector<2x128xf32>
    %62 = arith.mulf %46, %54 : vector<2x128xf32>
    %63 = arith.addf %61, %62 : vector<2x128xf32>
    %64 = math.tanh %63 : vector<2x128xf32>
    %65 = arith.mulf %60, %64 : vector<2x128xf32>
    %c1_i32 = arith.constant 1 : i32
    %c2_i32_25 = arith.constant 2 : i32
    %66 = arith.muli %c1_i32, %c2_i32_25 : i32
    %67 = arith.index_cast %66 : i32 to index
    %c0_26 = arith.constant 0 : index
    %68 = vector.load %arg13[%67, %c0_26] : memref<16x512xf32, #tpu.memory_space<vmem>>, vector<2x512xf32>
    %c0_27 = arith.constant 0 : index
    %c0_28 = arith.constant 0 : index
    %69 = vector.load %arg4[%c0_27, %c0_28] : memref<128x512xf32, #tpu.memory_space<vmem>>, vector<128x512xf32>
    %cst_29 = arith.constant dense<0.000000e+00> : vector<2x512xf32>
    %70 = tpu.matmul %65, %69, %cst_29 {dimension_numbers = #tpu.dot_dimension_numbers<[1], [0], [0], [1], [0, 0, 1, 1], [], []>} : vector<2x128xf32>, vector<128x512xf32>, vector<2x512xf32> -> vector<2x512xf32>
    %71 = arith.addf %68, %70 : vector<2x512xf32>
    %72 = vector.extract_strided_slice %71 {offsets = [0, 0], sizes = [2, 128], strides = [1, 1]} : vector<2x512xf32> to vector<2x128xf32>
    %73 = arith.negf %72 : vector<2x128xf32>
    %74 = math.exp %73 : vector<2x128xf32>
    %cst_30 = arith.constant 1.000000e+00 : f32
    %75 = vector.broadcast %cst_30 : f32 to vector<2x128xf32>
    %76 = arith.addf %75, %74 : vector<2x128xf32>
    %77 = arith.divf %75, %76 : vector<2x128xf32>
    %78 = vector.extract_strided_slice %71 {offsets = [0, 128], sizes = [2, 128], strides = [1, 1]} : vector<2x512xf32> to vector<2x128xf32>
    %79 = arith.negf %78 : vector<2x128xf32>
    %80 = math.exp %79 : vector<2x128xf32>
    %cst_31 = arith.constant 1.000000e+00 : f32
    %81 = vector.broadcast %cst_31 : f32 to vector<2x128xf32>
    %82 = arith.addf %81, %80 : vector<2x128xf32>
    %83 = arith.divf %81, %82 : vector<2x128xf32>
    %84 = vector.extract_strided_slice %71 {offsets = [0, 256], sizes = [2, 128], strides = [1, 1]} : vector<2x512xf32> to vector<2x128xf32>
    %85 = math.tanh %84 : vector<2x128xf32>
    %86 = vector.extract_strided_slice %71 {offsets = [0, 384], sizes = [2, 128], strides = [1, 1]} : vector<2x512xf32> to vector<2x128xf32>
    %87 = arith.negf %86 : vector<2x128xf32>
    %88 = math.exp %87 : vector<2x128xf32>
    %cst_32 = arith.constant 1.000000e+00 : f32
    %89 = vector.broadcast %cst_32 : f32 to vector<2x128xf32>
    %90 = arith.addf %89, %88 : vector<2x128xf32>
    %91 = arith.divf %89, %90 : vector<2x128xf32>
    %92 = arith.mulf %83, %63 : vector<2x128xf32>
    %93 = arith.mulf %77, %85 : vector<2x128xf32>
    %94 = arith.addf %92, %93 : vector<2x128xf32>
    %95 = math.tanh %94 : vector<2x128xf32>
    %96 = arith.mulf %91, %95 : vector<2x128xf32>
    %c2_i32_33 = arith.constant 2 : i32
    %c2_i32_34 = arith.constant 2 : i32
    %97 = arith.muli %c2_i32_33, %c2_i32_34 : i32
    %98 = arith.index_cast %97 : i32 to index
    %c0_35 = arith.constant 0 : index
    %99 = vector.load %arg13[%98, %c0_35] : memref<16x512xf32, #tpu.memory_space<vmem>>, vector<2x512xf32>
    %c0_36 = arith.constant 0 : index
    %c0_37 = arith.constant 0 : index
    %100 = vector.load %arg4[%c0_36, %c0_37] : memref<128x512xf32, #tpu.memory_space<vmem>>, vector<128x512xf32>
    %cst_38 = arith.constant dense<0.000000e+00> : vector<2x512xf32>
    %101 = tpu.matmul %96, %100, %cst_38 {dimension_numbers = #tpu.dot_dimension_numbers<[1], [0], [0], [1], [0, 0, 1, 1], [], []>} : vector<2x128xf32>, vector<128x512xf32>, vector<2x512xf32> -> vector<2x512xf32>
    %102 = arith.addf %99, %101 : vector<2x512xf32>
    %103 = vector.extract_strided_slice %102 {offsets = [0, 0], sizes = [2, 128], strides = [1, 1]} : vector<2x512xf32> to vector<2x128xf32>
    %104 = arith.negf %103 : vector<2x128xf32>
    %105 = math.exp %104 : vector<2x128xf32>
    %cst_39 = arith.constant 1.000000e+00 : f32
    %106 = vector.broadcast %cst_39 : f32 to vector<2x128xf32>
    %107 = arith.addf %106, %105 : vector<2x128xf32>
    %108 = arith.divf %106, %107 : vector<2x128xf32>
    %109 = vector.extract_strided_slice %102 {offsets = [0, 128], sizes = [2, 128], strides = [1, 1]} : vector<2x512xf32> to vector<2x128xf32>
    %110 = arith.negf %109 : vector<2x128xf32>
    %111 = math.exp %110 : vector<2x128xf32>
    %cst_40 = arith.constant 1.000000e+00 : f32
    %112 = vector.broadcast %cst_40 : f32 to vector<2x128xf32>
    %113 = arith.addf %112, %111 : vector<2x128xf32>
    %114 = arith.divf %112, %113 : vector<2x128xf32>
    %115 = vector.extract_strided_slice %102 {offsets = [0, 256], sizes = [2, 128], strides = [1, 1]} : vector<2x512xf32> to vector<2x128xf32>
    %116 = math.tanh %115 : vector<2x128xf32>
    %117 = vector.extract_strided_slice %102 {offsets = [0, 384], sizes = [2, 128], strides = [1, 1]} : vector<2x512xf32> to vector<2x128xf32>
    %118 = arith.negf %117 : vector<2x128xf32>
    %119 = math.exp %118 : vector<2x128xf32>
    %cst_41 = arith.constant 1.000000e+00 : f32
    %120 = vector.broadcast %cst_41 : f32 to vector<2x128xf32>
    %121 = arith.addf %120, %119 : vector<2x128xf32>
    %122 = arith.divf %120, %121 : vector<2x128xf32>
    %123 = arith.mulf %114, %94 : vector<2x128xf32>
    %124 = arith.mulf %108, %116 : vector<2x128xf32>
    %125 = arith.addf %123, %124 : vector<2x128xf32>
    %126 = math.tanh %125 : vector<2x128xf32>
    %127 = arith.mulf %122, %126 : vector<2x128xf32>
    %c3_i32 = arith.constant 3 : i32
    %c2_i32_42 = arith.constant 2 : i32
    %128 = arith.muli %c3_i32, %c2_i32_42 : i32
    %129 = arith.index_cast %128 : i32 to index
    %c0_43 = arith.constant 0 : index
    %130 = vector.load %arg13[%129, %c0_43] : memref<16x512xf32, #tpu.memory_space<vmem>>, vector<2x512xf32>
    %c0_44 = arith.constant 0 : index
    %c0_45 = arith.constant 0 : index
    %131 = vector.load %arg4[%c0_44, %c0_45] : memref<128x512xf32, #tpu.memory_space<vmem>>, vector<128x512xf32>
    %cst_46 = arith.constant dense<0.000000e+00> : vector<2x512xf32>
    %132 = tpu.matmul %127, %131, %cst_46 {dimension_numbers = #tpu.dot_dimension_numbers<[1], [0], [0], [1], [0, 0, 1, 1], [], []>} : vector<2x128xf32>, vector<128x512xf32>, vector<2x512xf32> -> vector<2x512xf32>
    %133 = arith.addf %130, %132 : vector<2x512xf32>
    %134 = vector.extract_strided_slice %133 {offsets = [0, 0], sizes = [2, 128], strides = [1, 1]} : vector<2x512xf32> to vector<2x128xf32>
    %135 = arith.negf %134 : vector<2x128xf32>
    %136 = math.exp %135 : vector<2x128xf32>
    %cst_47 = arith.constant 1.000000e+00 : f32
    %137 = vector.broadcast %cst_47 : f32 to vector<2x128xf32>
    %138 = arith.addf %137, %136 : vector<2x128xf32>
    %139 = arith.divf %137, %138 : vector<2x128xf32>
    %140 = vector.extract_strided_slice %133 {offsets = [0, 128], sizes = [2, 128], strides = [1, 1]} : vector<2x512xf32> to vector<2x128xf32>
    %141 = arith.negf %140 : vector<2x128xf32>
    %142 = math.exp %141 : vector<2x128xf32>
    %cst_48 = arith.constant 1.000000e+00 : f32
    %143 = vector.broadcast %cst_48 : f32 to vector<2x128xf32>
    %144 = arith.addf %143, %142 : vector<2x128xf32>
    %145 = arith.divf %143, %144 : vector<2x128xf32>
    %146 = vector.extract_strided_slice %133 {offsets = [0, 256], sizes = [2, 128], strides = [1, 1]} : vector<2x512xf32> to vector<2x128xf32>
    %147 = math.tanh %146 : vector<2x128xf32>
    %148 = vector.extract_strided_slice %133 {offsets = [0, 384], sizes = [2, 128], strides = [1, 1]} : vector<2x512xf32> to vector<2x128xf32>
    %149 = arith.negf %148 : vector<2x128xf32>
    %150 = math.exp %149 : vector<2x128xf32>
    %cst_49 = arith.constant 1.000000e+00 : f32
    %151 = vector.broadcast %cst_49 : f32 to vector<2x128xf32>
    %152 = arith.addf %151, %150 : vector<2x128xf32>
    %153 = arith.divf %151, %152 : vector<2x128xf32>
    %154 = arith.mulf %145, %125 : vector<2x128xf32>
    %155 = arith.mulf %139, %147 : vector<2x128xf32>
    %156 = arith.addf %154, %155 : vector<2x128xf32>
    %157 = math.tanh %156 : vector<2x128xf32>
    %158 = arith.mulf %153, %157 : vector<2x128xf32>
    %c4_i32 = arith.constant 4 : i32
    %c2_i32_50 = arith.constant 2 : i32
    %159 = arith.muli %c4_i32, %c2_i32_50 : i32
    %160 = arith.index_cast %159 : i32 to index
    %c0_51 = arith.constant 0 : index
    %161 = vector.load %arg13[%160, %c0_51] : memref<16x512xf32, #tpu.memory_space<vmem>>, vector<2x512xf32>
    %c0_52 = arith.constant 0 : index
    %c0_53 = arith.constant 0 : index
    %162 = vector.load %arg4[%c0_52, %c0_53] : memref<128x512xf32, #tpu.memory_space<vmem>>, vector<128x512xf32>
    %cst_54 = arith.constant dense<0.000000e+00> : vector<2x512xf32>
    %163 = tpu.matmul %158, %162, %cst_54 {dimension_numbers = #tpu.dot_dimension_numbers<[1], [0], [0], [1], [0, 0, 1, 1], [], []>} : vector<2x128xf32>, vector<128x512xf32>, vector<2x512xf32> -> vector<2x512xf32>
    %164 = arith.addf %161, %163 : vector<2x512xf32>
    %165 = vector.extract_strided_slice %164 {offsets = [0, 0], sizes = [2, 128], strides = [1, 1]} : vector<2x512xf32> to vector<2x128xf32>
    %166 = arith.negf %165 : vector<2x128xf32>
    %167 = math.exp %166 : vector<2x128xf32>
    %cst_55 = arith.constant 1.000000e+00 : f32
    %168 = vector.broadcast %cst_55 : f32 to vector<2x128xf32>
    %169 = arith.addf %168, %167 : vector<2x128xf32>
    %170 = arith.divf %168, %169 : vector<2x128xf32>
    %171 = vector.extract_strided_slice %164 {offsets = [0, 128], sizes = [2, 128], strides = [1, 1]} : vector<2x512xf32> to vector<2x128xf32>
    %172 = arith.negf %171 : vector<2x128xf32>
    %173 = math.exp %172 : vector<2x128xf32>
    %cst_56 = arith.constant 1.000000e+00 : f32
    %174 = vector.broadcast %cst_56 : f32 to vector<2x128xf32>
    %175 = arith.addf %174, %173 : vector<2x128xf32>
    %176 = arith.divf %174, %175 : vector<2x128xf32>
    %177 = vector.extract_strided_slice %164 {offsets = [0, 256], sizes = [2, 128], strides = [1, 1]} : vector<2x512xf32> to vector<2x128xf32>
    %178 = math.tanh %177 : vector<2x128xf32>
    %179 = vector.extract_strided_slice %164 {offsets = [0, 384], sizes = [2, 128], strides = [1, 1]} : vector<2x512xf32> to vector<2x128xf32>
    %180 = arith.negf %179 : vector<2x128xf32>
    %181 = math.exp %180 : vector<2x128xf32>
    %cst_57 = arith.constant 1.000000e+00 : f32
    %182 = vector.broadcast %cst_57 : f32 to vector<2x128xf32>
    %183 = arith.addf %182, %181 : vector<2x128xf32>
    %184 = arith.divf %182, %183 : vector<2x128xf32>
    %185 = arith.mulf %176, %156 : vector<2x128xf32>
    %186 = arith.mulf %170, %178 : vector<2x128xf32>
    %187 = arith.addf %185, %186 : vector<2x128xf32>
    %188 = math.tanh %187 : vector<2x128xf32>
    %189 = arith.mulf %184, %188 : vector<2x128xf32>
    %c5_i32 = arith.constant 5 : i32
    %c2_i32_58 = arith.constant 2 : i32
    %190 = arith.muli %c5_i32, %c2_i32_58 : i32
    %191 = arith.index_cast %190 : i32 to index
    %c0_59 = arith.constant 0 : index
    %192 = vector.load %arg13[%191, %c0_59] : memref<16x512xf32, #tpu.memory_space<vmem>>, vector<2x512xf32>
    %c0_60 = arith.constant 0 : index
    %c0_61 = arith.constant 0 : index
    %193 = vector.load %arg4[%c0_60, %c0_61] : memref<128x512xf32, #tpu.memory_space<vmem>>, vector<128x512xf32>
    %cst_62 = arith.constant dense<0.000000e+00> : vector<2x512xf32>
    %194 = tpu.matmul %189, %193, %cst_62 {dimension_numbers = #tpu.dot_dimension_numbers<[1], [0], [0], [1], [0, 0, 1, 1], [], []>} : vector<2x128xf32>, vector<128x512xf32>, vector<2x512xf32> -> vector<2x512xf32>
    %195 = arith.addf %192, %194 : vector<2x512xf32>
    %196 = vector.extract_strided_slice %195 {offsets = [0, 0], sizes = [2, 128], strides = [1, 1]} : vector<2x512xf32> to vector<2x128xf32>
    %197 = arith.negf %196 : vector<2x128xf32>
    %198 = math.exp %197 : vector<2x128xf32>
    %cst_63 = arith.constant 1.000000e+00 : f32
    %199 = vector.broadcast %cst_63 : f32 to vector<2x128xf32>
    %200 = arith.addf %199, %198 : vector<2x128xf32>
    %201 = arith.divf %199, %200 : vector<2x128xf32>
    %202 = vector.extract_strided_slice %195 {offsets = [0, 128], sizes = [2, 128], strides = [1, 1]} : vector<2x512xf32> to vector<2x128xf32>
    %203 = arith.negf %202 : vector<2x128xf32>
    %204 = math.exp %203 : vector<2x128xf32>
    %cst_64 = arith.constant 1.000000e+00 : f32
    %205 = vector.broadcast %cst_64 : f32 to vector<2x128xf32>
    %206 = arith.addf %205, %204 : vector<2x128xf32>
    %207 = arith.divf %205, %206 : vector<2x128xf32>
    %208 = vector.extract_strided_slice %195 {offsets = [0, 256], sizes = [2, 128], strides = [1, 1]} : vector<2x512xf32> to vector<2x128xf32>
    %209 = math.tanh %208 : vector<2x128xf32>
    %210 = vector.extract_strided_slice %195 {offsets = [0, 384], sizes = [2, 128], strides = [1, 1]} : vector<2x512xf32> to vector<2x128xf32>
    %211 = arith.negf %210 : vector<2x128xf32>
    %212 = math.exp %211 : vector<2x128xf32>
    %cst_65 = arith.constant 1.000000e+00 : f32
    %213 = vector.broadcast %cst_65 : f32 to vector<2x128xf32>
    %214 = arith.addf %213, %212 : vector<2x128xf32>
    %215 = arith.divf %213, %214 : vector<2x128xf32>
    %216 = arith.mulf %207, %187 : vector<2x128xf32>
    %217 = arith.mulf %201, %209 : vector<2x128xf32>
    %218 = arith.addf %216, %217 : vector<2x128xf32>
    %219 = math.tanh %218 : vector<2x128xf32>
    %220 = arith.mulf %215, %219 : vector<2x128xf32>
    %c6_i32 = arith.constant 6 : i32
    %c2_i32_66 = arith.constant 2 : i32
    %221 = arith.muli %c6_i32, %c2_i32_66 : i32
    %222 = arith.index_cast %221 : i32 to index
    %c0_67 = arith.constant 0 : index
    %223 = vector.load %arg13[%222, %c0_67] : memref<16x512xf32, #tpu.memory_space<vmem>>, vector<2x512xf32>
    %c0_68 = arith.constant 0 : index
    %c0_69 = arith.constant 0 : index
    %224 = vector.load %arg4[%c0_68, %c0_69] : memref<128x512xf32, #tpu.memory_space<vmem>>, vector<128x512xf32>
    %cst_70 = arith.constant dense<0.000000e+00> : vector<2x512xf32>
    %225 = tpu.matmul %220, %224, %cst_70 {dimension_numbers = #tpu.dot_dimension_numbers<[1], [0], [0], [1], [0, 0, 1, 1], [], []>} : vector<2x128xf32>, vector<128x512xf32>, vector<2x512xf32> -> vector<2x512xf32>
    %226 = arith.addf %223, %225 : vector<2x512xf32>
    %227 = vector.extract_strided_slice %226 {offsets = [0, 0], sizes = [2, 128], strides = [1, 1]} : vector<2x512xf32> to vector<2x128xf32>
    %228 = arith.negf %227 : vector<2x128xf32>
    %229 = math.exp %228 : vector<2x128xf32>
    %cst_71 = arith.constant 1.000000e+00 : f32
    %230 = vector.broadcast %cst_71 : f32 to vector<2x128xf32>
    %231 = arith.addf %230, %229 : vector<2x128xf32>
    %232 = arith.divf %230, %231 : vector<2x128xf32>
    %233 = vector.extract_strided_slice %226 {offsets = [0, 128], sizes = [2, 128], strides = [1, 1]} : vector<2x512xf32> to vector<2x128xf32>
    %234 = arith.negf %233 : vector<2x128xf32>
    %235 = math.exp %234 : vector<2x128xf32>
    %cst_72 = arith.constant 1.000000e+00 : f32
    %236 = vector.broadcast %cst_72 : f32 to vector<2x128xf32>
    %237 = arith.addf %236, %235 : vector<2x128xf32>
    %238 = arith.divf %236, %237 : vector<2x128xf32>
    %239 = vector.extract_strided_slice %226 {offsets = [0, 256], sizes = [2, 128], strides = [1, 1]} : vector<2x512xf32> to vector<2x128xf32>
    %240 = math.tanh %239 : vector<2x128xf32>
    %241 = vector.extract_strided_slice %226 {offsets = [0, 384], sizes = [2, 128], strides = [1, 1]} : vector<2x512xf32> to vector<2x128xf32>
    %242 = arith.negf %241 : vector<2x128xf32>
    %243 = math.exp %242 : vector<2x128xf32>
    %cst_73 = arith.constant 1.000000e+00 : f32
    %244 = vector.broadcast %cst_73 : f32 to vector<2x128xf32>
    %245 = arith.addf %244, %243 : vector<2x128xf32>
    %246 = arith.divf %244, %245 : vector<2x128xf32>
    %247 = arith.mulf %238, %218 : vector<2x128xf32>
    %248 = arith.mulf %232, %240 : vector<2x128xf32>
    %249 = arith.addf %247, %248 : vector<2x128xf32>
    %250 = math.tanh %249 : vector<2x128xf32>
    %251 = arith.mulf %246, %250 : vector<2x128xf32>
    %c7_i32 = arith.constant 7 : i32
    %c2_i32_74 = arith.constant 2 : i32
    %252 = arith.muli %c7_i32, %c2_i32_74 : i32
    %253 = arith.index_cast %252 : i32 to index
    %c0_75 = arith.constant 0 : index
    %254 = vector.load %arg13[%253, %c0_75] : memref<16x512xf32, #tpu.memory_space<vmem>>, vector<2x512xf32>
    %c0_76 = arith.constant 0 : index
    %c0_77 = arith.constant 0 : index
    %255 = vector.load %arg4[%c0_76, %c0_77] : memref<128x512xf32, #tpu.memory_space<vmem>>, vector<128x512xf32>
    %cst_78 = arith.constant dense<0.000000e+00> : vector<2x512xf32>
    %256 = tpu.matmul %251, %255, %cst_78 {dimension_numbers = #tpu.dot_dimension_numbers<[1], [0], [0], [1], [0, 0, 1, 1], [], []>} : vector<2x128xf32>, vector<128x512xf32>, vector<2x512xf32> -> vector<2x512xf32>
    %257 = arith.addf %254, %256 : vector<2x512xf32>
    %258 = vector.extract_strided_slice %257 {offsets = [0, 0], sizes = [2, 128], strides = [1, 1]} : vector<2x512xf32> to vector<2x128xf32>
    %259 = arith.negf %258 : vector<2x128xf32>
    %260 = math.exp %259 : vector<2x128xf32>
    %cst_79 = arith.constant 1.000000e+00 : f32
    %261 = vector.broadcast %cst_79 : f32 to vector<2x128xf32>
    %262 = arith.addf %261, %260 : vector<2x128xf32>
    %263 = arith.divf %261, %262 : vector<2x128xf32>
    %264 = vector.extract_strided_slice %257 {offsets = [0, 128], sizes = [2, 128], strides = [1, 1]} : vector<2x512xf32> to vector<2x128xf32>
    %265 = arith.negf %264 : vector<2x128xf32>
    %266 = math.exp %265 : vector<2x128xf32>
    %cst_80 = arith.constant 1.000000e+00 : f32
    %267 = vector.broadcast %cst_80 : f32 to vector<2x128xf32>
    %268 = arith.addf %267, %266 : vector<2x128xf32>
    %269 = arith.divf %267, %268 : vector<2x128xf32>
    %270 = vector.extract_strided_slice %257 {offsets = [0, 256], sizes = [2, 128], strides = [1, 1]} : vector<2x512xf32> to vector<2x128xf32>
    %271 = math.tanh %270 : vector<2x128xf32>
    %272 = vector.extract_strided_slice %257 {offsets = [0, 384], sizes = [2, 128], strides = [1, 1]} : vector<2x512xf32> to vector<2x128xf32>
    %273 = arith.negf %272 : vector<2x128xf32>
    %274 = math.exp %273 : vector<2x128xf32>
    %cst_81 = arith.constant 1.000000e+00 : f32
    %275 = vector.broadcast %cst_81 : f32 to vector<2x128xf32>
    %276 = arith.addf %275, %274 : vector<2x128xf32>
    %277 = arith.divf %275, %276 : vector<2x128xf32>
    %278 = arith.mulf %269, %249 : vector<2x128xf32>
    %279 = arith.mulf %263, %271 : vector<2x128xf32>
    %280 = arith.addf %278, %279 : vector<2x128xf32>
    %281 = math.tanh %280 : vector<2x128xf32>
    %282 = arith.mulf %277, %281 : vector<2x128xf32>
    %c8_i32 = arith.constant 8 : i32
    %c0_82 = arith.constant 0 : index
    %c0_83 = arith.constant 0 : index
    %283 = vector.load %arg6[%c0_82, %c0_83] : memref<128x128xf32, #tpu.memory_space<vmem>>, vector<128x128xf32>
    %cst_84 = arith.constant dense<0.000000e+00> : vector<2x128xf32>
    %284 = tpu.matmul %282, %283, %cst_84 {dimension_numbers = #tpu.dot_dimension_numbers<[1], [0], [0], [1], [0, 0, 1, 1], [], []>} : vector<2x128xf32>, vector<128x128xf32>, vector<2x128xf32> -> vector<2x128xf32>
    %c0_85 = arith.constant 0 : index
    %c0_86 = arith.constant 0 : index
    %285 = vector.load %arg7[%c0_85, %c0_86] : memref<1x128xf32, #tpu.memory_space<vmem>>, vector<1x128xf32>
    %286 = vector.broadcast %285 : vector<1x128xf32> to vector<2x128xf32>
    %287 = arith.addf %284, %286 : vector<2x128xf32>
    %cst_87 = arith.constant 0.000000e+00 : f32
    %288 = vector.broadcast %cst_87 : f32 to vector<2x128xf32>
    %289 = arith.maximumf %287, %288 : vector<2x128xf32>
    %c0_88 = arith.constant 0 : index
    %c0_89 = arith.constant 0 : index
    %290 = vector.load %arg8[%c0_88, %c0_89] : memref<128x64xf32, #tpu.memory_space<vmem>>, vector<128x64xf32>
    %cst_90 = arith.constant dense<0.000000e+00> : vector<2x64xf32>
    %291 = tpu.matmul %289, %290, %cst_90 {dimension_numbers = #tpu.dot_dimension_numbers<[1], [0], [0], [1], [0, 0, 1, 1], [], []>} : vector<2x128xf32>, vector<128x64xf32>, vector<2x64xf32> -> vector<2x64xf32>
    %c0_91 = arith.constant 0 : index
    %c0_92 = arith.constant 0 : index
    %292 = vector.load %arg9[%c0_91, %c0_92] : memref<1x64xf32, #tpu.memory_space<vmem>>, vector<1x64xf32>
    %293 = vector.broadcast %292 : vector<1x64xf32> to vector<2x64xf32>
    %294 = arith.addf %291, %293 : vector<2x64xf32>
    %cst_93 = arith.constant 0.000000e+00 : f32
    %295 = vector.broadcast %cst_93 : f32 to vector<2x64xf32>
    %296 = arith.maximumf %294, %295 : vector<2x64xf32>
    %c0_94 = arith.constant 0 : index
    %c0_95 = arith.constant 0 : index
    %297 = vector.load %arg10[%c0_94, %c0_95] : memref<64x2xf32, #tpu.memory_space<vmem>>, vector<64x2xf32>
    %cst_96 = arith.constant dense<0.000000e+00> : vector<2x2xf32>
    %298 = tpu.matmul %296, %297, %cst_96 {dimension_numbers = #tpu.dot_dimension_numbers<[1], [0], [0], [1], [0, 0, 1, 1], [], []>} : vector<2x64xf32>, vector<64x2xf32>, vector<2x2xf32> -> vector<2x2xf32>
    %c0_97 = arith.constant 0 : index
    %c0_98 = arith.constant 0 : index
    %299 = vector.load %arg11[%c0_97, %c0_98] : memref<1x2xf32, #tpu.memory_space<vmem>>, vector<1x2xf32>
    %300 = vector.broadcast %299 : vector<1x2xf32> to vector<2x2xf32>
    %301 = arith.addf %298, %300 : vector<2x2xf32>
    %c0_99 = arith.constant 0 : index
    %c0_100 = arith.constant 0 : index
    %302 = vector.load %arg12[%c0_99, %c0_100] : memref<2x2xf32, #tpu.memory_space<vmem>>, vector<2x2xf32>
    tpu.vector_store %arg12[%c0_99, %c0_100], %301 {strides = array<i32>} : memref<2x2xf32, #tpu.memory_space<vmem>>, vector<2x2xf32>,
    return
  }
}

</mosaic_0001>

<llo_original>
// kernel: tpu_custom_call.1
$region0: #{tpu_custom_call.1}
  #allocation0 [shape = 'u32[]', space=smem, size = 0x4, offset = 0x4, fixed_abs, tag = 'smem constant byte address 0x4 - core index']
  #allocation1 [shape = 'u32[144,128]{1,0:T(1,128)}', space=vmem, size = 0x12000, scoped, tag = 'internal scratch']
  #allocation2 [shape = 'f32[16,512]{1,0:T(8,128)}', space=vmem, size = 0x8000, scoped, tag = 'scratch operand']
  %s0 = inlined_call_operand.vmem [shape: f32[16,24], index: 0, kind: input, shape index: {}]
  %s1 = inlined_call_operand.vmem [shape: f32[1,24], index: 1, kind: input, shape index: {}]
  %s2 = inlined_call_operand.vmem [shape: f32[1,24], index: 2, kind: input, shape index: {}]
  %s3 = inlined_call_operand.vmem [shape: f32[24,512], index: 3, kind: input, shape index: {}]
  %s4 = inlined_call_operand.hbm [shape: f32[128,512], index: 4, kind: input, shape index: {}]
  %s5 = inlined_call_operand.vmem [shape: f32[1,512], index: 5, kind: input, shape index: {}]
  %s6 = inlined_call_operand.vmem [shape: f32[128,128], index: 6, kind: input, shape index: {}]
  %s7 = inlined_call_operand.vmem [shape: f32[1,128], index: 7, kind: input, shape index: {}]
  %s8 = inlined_call_operand.vmem [shape: f32[128,64], index: 8, kind: input, shape index: {}]
  %s9 = inlined_call_operand.vmem [shape: f32[1,64], index: 9, kind: input, shape index: {}]
  %s10 = inlined_call_operand.vmem [shape: f32[64,2], index: 10, kind: input, shape index: {}]
  %s11 = inlined_call_operand.vmem [shape: f32[1,2], index: 11, kind: input, shape index: {}]
  %s12 = inlined_call_operand.hbm [shape: f32[2,2], index: 12, kind: output, shape index: {}]
  %s13 = sld [smem:[#allocation0]]
  $region62: #{tpu_custom_call.1} parent=0
    _
  %s15 = ssub.s32 1, %s13
  %s16 = scalar_select 0, %s15, %s13
  $region1: #{tpu_custom_call.1} parent=0
    #allocation3 [shape = 'u8[262144]{0}', space=vmem, size = 0x40000, scoped, tag = 'input window, operand 4, single buffered']
    #allocation4 [shape = 's32[1]{0}', space=sflag, size = 0x4, scoped, tag = 'scoped memory for tpu_custom_call.1']
    #allocation5 [shape = 's32[1]{0}', space=sflag, size = 0x4, scoped, tag = 'scoped memory for tpu_custom_call.1']
    #allocation6 [shape = 'u8[1024]{0}', space=vmem, size = 0x400, scoped, tag = 'output window, operand 0, single buffered']
    %17 = vsyncpa [#allocation4], 0
    %18 = vsyncpa [#allocation5], 0
    // Predicated region
    $region2: #{tpu_custom_call.1} parent=1 // pred_check
      _
    $region3: #{tpu_custom_call.1} parent=1 // pred_check_branch
      %20 = sbr.rel (0) target = $region5
    $region4: #{tpu_custom_call.1} parent=1 // pred_region
      _
    $region5: #{tpu_custom_call.1} parent=1 // pred_fallthru
      _
    // Predicated region
    $region6: #{tpu_custom_call.1} parent=1 // pred_check
      _
    $region7: #{tpu_custom_call.1} parent=1 // pred_check_branch
      %22 = sbr.rel (0) target = $region9
    $region8: #{tpu_custom_call.1} parent=1 // pred_region
      _
    $region9: #{tpu_custom_call.1} parent=1 // pred_fallthru
      _
    // Predicated region
    $region10: #{tpu_custom_call.1} parent=1 // pred_check
      _
    $region11: #{tpu_custom_call.1} parent=1 // pred_check_branch
      %24 = sbr.rel (0) target = $region13
    $region12: #{tpu_custom_call.1} parent=1 // pred_region
      _
    $region13: #{tpu_custom_call.1} parent=1 // pred_fallthru
      _
    // Predicated region
    $region14: #{tpu_custom_call.1} parent=1 // pred_check
      _
    $region15: #{tpu_custom_call.1} parent=1 // pred_check_branch
      %26 = sbr.rel (0) target = $region17
    $region16: #{tpu_custom_call.1} parent=1 // pred_region
      _
    $region17: #{tpu_custom_call.1} parent=1 // pred_fallthru
      _
    // Predicated region
    $region18: #{tpu_custom_call.1} parent=1 // pred_check
      _
    $region19: #{tpu_custom_call.1} parent=1 // pred_check_branch
      %28 = sbr.rel (0) target = $region21
    $region20: #{tpu_custom_call.1} parent=1 // pred_region
      %s30 = ssub.s32 8192, 8192
      %31 = vsyncadd [#allocation4], %s30
      %s32 = sshll.u32 [#allocation3], 4
      %s33 = int_to_ptr.vmem [resolvable:$true] %s32
      %38 = dma.hbm_to_vmem [thread:$0]  %s4, 8192, %s33, [#allocation4], 512, 512, 32
    $region21: #{tpu_custom_call.1} parent=1 // pred_fallthru
      _
    // Predicated region
    $region22: #{tpu_custom_call.1} parent=1 // pred_check
      _
    $region23: #{tpu_custom_call.1} parent=1 // pred_check_branch
      %40 = sbr.rel (0) target = $region25
    $region24: #{tpu_custom_call.1} parent=1 // pred_region
      _
    $region25: #{tpu_custom_call.1} parent=1 // pred_fallthru
      _
    // Predicated region
    $region26: #{tpu_custom_call.1} parent=1 // pred_check
      _
    $region27: #{tpu_custom_call.1} parent=1 // pred_check_branch
      %42 = sbr.rel (0) target = $region29
    $region28: #{tpu_custom_call.1} parent=1 // pred_region
      _
    $region29: #{tpu_custom_call.1} parent=1 // pred_fallthru
      _
    // Predicated region
    $region30: #{tpu_custom_call.1} parent=1 // pred_check
      _
    $region31: #{tpu_custom_call.1} parent=1 // pred_check_branch
      %44 = sbr.rel (0) target = $region33
    $region32: #{tpu_custom_call.1} parent=1 // pred_region
      _
    $region33: #{tpu_custom_call.1} parent=1 // pred_fallthru
      _
    // Predicated region
    $region34: #{tpu_custom_call.1} parent=1 // pred_check
      _
    $region35: #{tpu_custom_call.1} parent=1 // pred_check_branch
      %46 = sbr.rel (0) target = $region37
    $region36: #{tpu_custom_call.1} parent=1 // pred_region
      _
    $region37: #{tpu_custom_call.1} parent=1 // pred_fallthru
      _
    // Predicated region
    $region38: #{tpu_custom_call.1} parent=1 // pred_check
      _
    $region39: #{tpu_custom_call.1} parent=1 // pred_check_branch
      %48 = sbr.rel (0) target = $region41
    $region40: #{tpu_custom_call.1} parent=1 // pred_region
      _
    $region41: #{tpu_custom_call.1} parent=1 // pred_fallthru
      _
    // Predicated region
    $region42: #{tpu_custom_call.1} parent=1 // pred_check
      _
    $region43: #{tpu_custom_call.1} parent=1 // pred_check_branch
      %50 = sbr.rel (0) target = $region45
    $region44: #{tpu_custom_call.1} parent=1 // pred_region
      _
    $region45: #{tpu_custom_call.1} parent=1 // pred_fallthru
      _
    // Predicated region
    $region46: #{tpu_custom_call.1} parent=1 // pred_check
      _
    $region47: #{tpu_custom_call.1} parent=1 // pred_check_branch
      %52 = sbr.rel (0) target = $region49
    $region48: #{tpu_custom_call.1} parent=1 // pred_region
      _
    $region49: #{tpu_custom_call.1} parent=1 // pred_fallthru
      _
    // Predicated region
    $region50: #{tpu_custom_call.1} parent=1 // pred_check
      _
    $region51: #{tpu_custom_call.1} parent=1 // pred_check_branch
      %54 = sbr.rel (0) target = $region53
    $region52: #{tpu_custom_call.1} parent=1 // pred_region
      %55 = dma.done [#allocation4], 8192
    $region53: #{tpu_custom_call.1} parent=1 // pred_fallthru
      _
    %v56 = vld [vmem:[%s0] sm:$0xff]
    %v57 = vld [vmem:[%s0 + $0x8] sm:$0xff]
    %vm58 = vcmask 195584
    %v59 = vsel %vm58, %v56, 0.0
    %60 = vadd.xlane.f32.xlu0 %v59
    %v61 = vpop.xlane.xlu0 %60
    %v62 = vsel %vm58, %v57, 0.0
    %63 = vadd.xlane.f32.xlu0 %v62
    %v64 = vpop.xlane.xlu0 %63
    %v65 = vrcp.pop 24.0
    %v66 = vmul.f32 %v61, %v65
    %v67 = vmul.f32 %v64, %v65
    %v68 = vsub.f32 %v56, %v66
    %v69 = vsub.f32 %v57, %v67
    %v70 = vmul.f32 %v68, %v68
    %v71 = vmul.f32 %v69, %v69
    %v72 = vsel %vm58, %v70, 0.0
    %73 = vadd.xlane.f32.xlu0 %v72
    %v74 = vpop.xlane.xlu0 %73
    %v75 = vsel %vm58, %v71, 0.0
    %76 = vadd.xlane.f32.xlu0 %v75
    %v77 = vpop.xlane.xlu0 %76
    %v78 = vmul.f32 %v74, %v65
    %v79 = vmul.f32 %v77, %v65
    %v80 = vadd.f32 %v78, 1e-05
    %v81 = vadd.f32 %v79, 1e-05
    %v82 = vrsqrt.pop %v80
    %v83 = vrsqrt.pop %v81
    %v84 = vmul.f32 %v68, %v82
    %v85 = vmul.f32 %v69, %v83
    %v86 = vld [vmem:[%s1] sm:$0x1]
    %v88 = vlaneseq
    %v89 = vshrl.u32 %v88, 7
    %v90 = vsub.s32 0, %v89
    %v91 = vrot.slane %v86, %v90
    %v93 = vmul.f32 %v84, %v91
    %v94 = vmul.f32 %v85, %v91
    %v95 = vld [vmem:[%s2] sm:$0x1]
    %v97 = vlaneseq
    %v98 = vshrl.u32 %v97, 7
    %v99 = vsub.s32 0, %v98
    %v100 = vrot.slane %v95, %v99
    %v102 = vadd.f32 %v93, %v100
    %v103 = vadd.f32 %v94, %v100
    %v104 = vld [vmem:[%s3] sm:$0xff]
    %v105 = vld [vmem:[%s3 + $0x8] sm:$0xff]
    %v106 = vld [vmem:[%s3 + $0x10] sm:$0xff]
    %v107 = vld [vmem:[%s3 + $0x18] sm:$0xff]
    %v108 = vld [vmem:[%s3 + $0x20] sm:$0xff]
    %v109 = vld [vmem:[%s3 + $0x28] sm:$0xff]
    %v110 = vld [vmem:[%s3 + $0x30] sm:$0xff]
    %v111 = vld [vmem:[%s3 + $0x38] sm:$0xff]
    %v112 = vld [vmem:[%s3 + $0x40] sm:$0xff]
    %v113 = vld [vmem:[%s3 + $0x48] sm:$0xff]
    %v114 = vld [vmem:[%s3 + $0x50] sm:$0xff]
    %v115 = vld [vmem:[%s3 + $0x58] sm:$0xff]
    %v116 = vld [vmem:[%s5] sm:$0xf]
    %v118 = vlaneseq
    %v119 = vshrl.u32 %v118, 7
    %v120 = vsub.s32 0, %v119
    %v121 = vrot.slane %v116, %v120
    %v122 = vlaneseq
    %v123 = vshrl.u32 %v122, 7
    %v124 = vsub.s32 1, %v123
    %v125 = vrot.slane %v116, %v124
    %v126 = vlaneseq
    %v127 = vshrl.u32 %v126, 7
    %v128 = vsub.s32 2, %v127
    %v129 = vrot.slane %v116, %v128
    %v130 = vlaneseq
    %v131 = vshrl.u32 %v130, 7
    %v132 = vsub.s32 3, %v131
    %v133 = vrot.slane %v116, %v132
    %v139 = vsel %vm58, %v102, 0
    %v142 = vsel %vm58, %v103, 0
    %144 = vmatprep.subr.mxu0 0.0
    %145 = vmatpush1.msra.mxu0 0.0
    %146 = vmatprep.subr.mxu0 0.0
    %147 = vmatpush1.msra.mxu0 0.0
    %148 = vmatprep.subr.mxu0 0.0
    %149 = vmatpush1.msra.mxu0 0.0
    %150 = vmatprep.subr.mxu0 0.0
    %151 = vmatpush1.msra.mxu0 0.0
    %152 = vmatprep.subr.mxu0 0.0
    %153 = vmatpush1.msra.mxu0 0.0
    %154 = vmatprep.subr.mxu0 0.0
    %155 = vmatpush1.msra.mxu0 0.0
    %156 = vmatprep.subr.mxu0 0.0
    %157 = vmatpush1.msra.mxu0 0.0
    %158 = vmatprep.subr.mxu0 0.0
    %159 = vmatpush1.msra.mxu0 0.0
    %160 = vmatprep.subr.mxu0 0.0
    %161 = vmatpush1.msra.mxu0 0.0
    %162 = vmatprep.subr.mxu0 0.0
    %163 = vmatpush1.msra.mxu0 0.0
    %164 = vmatprep.subr.mxu0 0.0
    %165 = vmatpush1.msra.mxu0 0.0
    %166 = vmatprep.subr.mxu0 0.0
    %167 = vmatpush1.msra.mxu0 0.0
    %168 = vmatprep.subr.mxu0 0.0
    %169 = vmatpush1.msra.mxu0 0.0
    %170 = vmatprep.subr.mxu0 %v113
    %171 = vmatpush1.msra.mxu0 %v112
    %172 = vmatprep.subr.mxu0 %v109
    %173 = vmatpush1.msra.mxu0 %v108
    %174 = vmatprep.subr.mxu0 %v105
    %175 = vmatpush1.msra.mxu0 %v104
    %176 = vmatprep.subr.mxu0 0.0
    %177 = vmatpush2.msra.mxu0 0.0
    %178 = vmatprep.subr.mxu0 0.0
    %179 = vmatpush2.msra.mxu0 0.0
    %180 = vmatprep.subr.mxu0 0.0
    %181 = vmatpush2.msra.mxu0 0.0
    %182 = vmatprep.subr.mxu0 0.0
    %183 = vmatpush2.msra.mxu0 0.0
    %184 = vmatprep.subr.mxu0 0.0
    %185 = vmatpush2.msra.mxu0 0.0
    %186 = vmatprep.subr.mxu0 0.0
    %187 = vmatpush2.msra.mxu0 0.0
    %188 = vmatprep.subr.mxu0 0.0
    %189 = vmatpush2.msra.mxu0 0.0
    %190 = vmatprep.subr.mxu0 0.0
    %191 = vmatpush2.msra.mxu0 0.0
    %192 = vmatprep.subr.mxu0 0.0
    %193 = vmatpush2.msra.mxu0 0.0
    %194 = vmatprep.subr.mxu0 0.0
    %195 = vmatpush2.msra.mxu0 0.0
    %196 = vmatprep.subr.mxu0 0.0
    %197 = vmatpush2.msra.mxu0 0.0
    %198 = vmatprep.subr.mxu0 0.0
    %199 = vmatpush2.msra.mxu0 0.0
    %200 = vmatprep.subr.mxu0 0.0
    %201 = vmatpush2.msra.mxu0 0.0
    %202 = vmatprep.subr.mxu0 0.0
    %203 = vmatpush2.msra.mxu0 0.0
    %204 = vmatprep.subr.mxu0 0.0
    %205 = vmatpush2.msra.mxu0 0.0
    %206 = vmatprep.subr.mxu0 0.0
    %207 = vmatpush2.msra.mxu0 0.0
    %208 = vmatprep.mubr.f32.mxu0 0.0
    %209 = vmatmul.mubr.f32.gmra.mxu0 %v139
    %v210 = vpop.f32.mrf.mxu0
    %v211 = vadd.f32 %v121, %v210
    %v212 = vpop.f32.mrf.mxu0
    %v213 = vadd.f32 %v125, %v212
    %214 = vmatprep.mubr.f32.mxu0 0.0
    %215 = vmatmul.mubr.f32.gmra.mxu0 %v142
    %v216 = vpop.f32.mrf.mxu0
    %v217 = vadd.f32 %v121, %v216
    %v218 = vpop.f32.mrf.mxu0
    %v219 = vadd.f32 %v125, %v218
    %220 = vdwg.mxu0
    %221 = vmatprep.subr.mxu0 0.0
    %222 = vmatpush1.msra.mxu0 0.0
    %223 = vmatprep.subr.mxu0 0.0
    %224 = vmatpush1.msra.mxu0 0.0
    %225 = vmatprep.subr.mxu0 0.0
    %226 = vmatpush1.msra.mxu0 0.0
    %227 = vmatprep.subr.mxu0 0.0
    %228 = vmatpush1.msra.mxu0 0.0
    %229 = vmatprep.subr.mxu0 0.0
    %230 = vmatpush1.msra.mxu0 0.0
    %231 = vmatprep.subr.mxu0 0.0
    %232 = vmatpush1.msra.mxu0 0.0
    %233 = vmatprep.subr.mxu0 0.0
    %234 = vmatpush1.msra.mxu0 0.0
    %235 = vmatprep.subr.mxu0 0.0
    %236 = vmatpush1.msra.mxu0 0.0
    %237 = vmatprep.subr.mxu0 0.0
    %238 = vmatpush1.msra.mxu0 0.0
    %239 = vmatprep.subr.mxu0 0.0
    %240 = vmatpush1.msra.mxu0 0.0
    %241 = vmatprep.subr.mxu0 0.0
    %242 = vmatpush1.msra.mxu0 0.0
    %243 = vmatprep.subr.mxu0 0.0
    %244 = vmatpush1.msra.mxu0 0.0
    %245 = vmatprep.subr.mxu0 0.0
    %246 = vmatpush1.msra.mxu0 0.0
    %247 = vmatprep.subr.mxu0 %v115
    %248 = vmatpush1.msra.mxu0 %v114
    %249 = vmatprep.subr.mxu0 %v111
    %250 = vmatpush1.msra.mxu0 %v110
    %251 = vmatprep.subr.mxu0 %v107
    %252 = vmatpush1.msra.mxu0 %v106
    %253 = vmatprep.subr.mxu0 0.0
    %254 = vmatpush2.msra.mxu0 0.0
    %255 = vmatprep.subr.mxu0 0.0
    %256 = vmatpush2.msra.mxu0 0.0
    %257 = vmatprep.subr.mxu0 0.0
    %258 = vmatpush2.msra.mxu0 0.0
    %259 = vmatprep.subr.mxu0 0.0
    %260 = vmatpush2.msra.mxu0 0.0
    %261 = vmatprep.subr.mxu0 0.0
    %262 = vmatpush2.msra.mxu0 0.0
    %263 = vmatprep.subr.mxu0 0.0
    %264 = vmatpush2.msra.mxu0 0.0
    %265 = vmatprep.subr.mxu0 0.0
    %266 = vmatpush2.msra.mxu0 0.0
    %267 = vmatprep.subr.mxu0 0.0
    %268 = vmatpush2.msra.mxu0 0.0
    %269 = vmatprep.subr.mxu0 0.0
    %270 = vmatpush2.msra.mxu0 0.0
    %271 = vmatprep.subr.mxu0 0.0
    %272 = vmatpush2.msra.mxu0 0.0
    %273 = vmatprep.subr.mxu0 0.0
    %274 = vmatpush2.msra.mxu0 0.0
    %275 = vmatprep.subr.mxu0 0.0
    %276 = vmatpush2.msra.mxu0 0.0
    %277 = vmatprep.subr.mxu0 0.0
    %278 = vmatpush2.msra.mxu0 0.0
    %279 = vmatprep.subr.mxu0 0.0
    %280 = vmatpush2.msra.mxu0 0.0
    %281 = vmatprep.subr.mxu0 0.0
    %282 = vmatpush2.msra.mxu0 0.0
    %283 = vmatprep.subr.mxu0 0.0
    %284 = vmatpush2.msra.mxu0 0.0
    %285 = vmatprep.mubr.f32.mxu0 0.0
    %286 = vmatmul.mubr.f32.gmra.mxu0 %v139
    %v287 = vpop.f32.mrf.mxu0
    %v288 = vadd.f32 %v129, %v287
    %v289 = vpop.f32.mrf.mxu0
    %v290 = vadd.f32 %v133, %v289
    %291 = vmatprep.mubr.f32.mxu0 0.0
    %292 = vmatmul.mubr.f32.gmra.mxu0 %v142
    %v293 = vpop.f32.mrf.mxu0
    %v294 = vadd.f32 %v129, %v293
    %v295 = vpop.f32.mrf.mxu0
    %v296 = vadd.f32 %v133, %v295
    %297 = vdwg.mxu0
    %298 = vst [vmem:[#allocation2] sm:$0xff] %v211
    %299 = vst [vmem:[#allocation2 + $0x8] sm:$0xff] %v213
    %300 = vst [vmem:[#allocation2 + $0x10] sm:$0xff] %v288
    %301 = vst [vmem:[#allocation2 + $0x18] sm:$0xff] %v290
    %302 = vst [vmem:[#allocation2 + $0x20] sm:$0xff] %v217
    %303 = vst [vmem:[#allocation2 + $0x28] sm:$0xff] %v219
    %304 = vst [vmem:[#allocation2 + $0x30] sm:$0xff] %v294
    %305 = vst [vmem:[#allocation2 + $0x38] sm:$0xff] %v296
    %v306 = vld [vmem:[#allocation2] sm:$0x3]
    %v307 = vld [vmem:[#allocation2 + $0x8] sm:$0x3]
    %v308 = vld [vmem:[#allocation2 + $0x10] sm:$0x3]
    %v309 = vld [vmem:[#allocation2 + $0x18] sm:$0x3]
    %v310 = vld [vmem:[#allocation3] sm:$0xff]
    %v311 = vld [vmem:[#allocation3 + $0x8] sm:$0xff]
    %v312 = vld [vmem:[#allocation3 + $0x10] sm:$0xff]
    %v313 = vld [vmem:[#allocation3 + $0x18] sm:$0xff]
    %v314 = vld [vmem:[#allocation3 + $0x20] sm:$0xff]
    %v315 = vld [vmem:[#allocation3 + $0x28] sm:$0xff]
    %v316 = vld [vmem:[#allocation3 + $0x30] sm:$0xff]
    %v317 = vld [vmem:[#allocation3 + $0x38] sm:$0xff]
    %v318 = vld [vmem:[#allocation3 + $0x40] sm:$0xff]
    %v319 = vld [vmem:[#allocation3 + $0x48] sm:$0xff]
    %v320 = vld [vmem:[#allocation3 + $0x50] sm:$0xff]
    %v321 = vld [vmem:[#allocation3 + $0x58] sm:$0xff]
    %v322 = vld [vmem:[#allocation3 + $0x60] sm:$0xff]
    %v323 = vld [vmem:[#allocation3 + $0x68] sm:$0xff]
    %v324 = vld [vmem:[#allocation3 + $0x70] sm:$0xff]
    %v325 = vld [vmem:[#allocation3 + $0x78] sm:$0xff]
    %v326 = vld [vmem:[#allocation3 + $0x80] sm:$0xff]
    %v327 = vld [vmem:[#allocation3 + $0x88] sm:$0xff]
    %v328 = vld [vmem:[#allocation3 + $0x90] sm:$0xff]
    %v329 = vld [vmem:[#allocation3 + $0x98] sm:$0xff]
    %v330 = vld [vmem:[#allocation3 + $0xa0] sm:$0xff]
    %v331 = vld [vmem:[#allocation3 + $0xa8] sm:$0xff]
    %v332 = vld [vmem:[#allocation3 + $0xb0] sm:$0xff]
    %v333 = vld [vmem:[#allocation3 + $0xb8] sm:$0xff]
    %v334 = vld [vmem:[#allocation3 + $0xc0] sm:$0xff]
    %v335 = vld [vmem:[#allocation3 + $0xc8] sm:$0xff]
    %v336 = vld [vmem:[#allocation3 + $0xd0] sm:$0xff]
    %v337 = vld [vmem:[#allocation3 + $0xd8] sm:$0xff]
    %v338 = vld [vmem:[#allocation3 + $0xe0] sm:$0xff]
    %v339 = vld [vmem:[#allocation3 + $0xe8] sm:$0xff]
    %v340 = vld [vmem:[#allocation3 + $0xf0] sm:$0xff]
    %v341 = vld [vmem:[#allocation3 + $0xf8] sm:$0xff]
    %v342 = vld [vmem:[#allocation3 + $0x100] sm:$0xff]
    %v343 = vld [vmem:[#allocation3 + $0x108] sm:$0xff]
    %v344 = vld [vmem:[#allocation3 + $0x110] sm:$0xff]
    %v345 = vld [vmem:[#allocation3 + $0x118] sm:$0xff]
    %v346 = vld [vmem:[#allocation3 + $0x120] sm:$0xff]
    %v347 = vld [vmem:[#allocation3 + $0x128] sm:$0xff]
    %v348 = vld [vmem:[#allocation3 + $0x130] sm:$0xff]
    %v349 = vld [vmem:[#allocation3 + $0x138] sm:$0xff]
    %v350 = vld [vmem:[#allocation3 + $0x140] sm:$0xff]
    %v351 = vld [vmem:[#allocation3 + $0x148] sm:$0xff]
    %v352 = vld [vmem:[#allocation3 + $0x150] sm:$0xff]
    %v353 = vld [vmem:[#allocation3 + $0x158] sm:$0xff]
    %v354 = vld [vmem:[#allocation3 + $0x160] sm:$0xff]
    %v355 = vld [vmem:[#allocation3 + $0x168] sm:$0xff]
    %v356 = vld [vmem:[#allocation3 + $0x170] sm:$0xff]
    %v357 = vld [vmem:[#allocation3 + $0x178] sm:$0xff]
    %v358 = vld [vmem:[#allocation3 + $0x180] sm:$0xff]
    %v359 = vld [vmem:[#allocation3 + $0x188] sm:$0xff]
    %v360 = vld [vmem:[#allocation3 + $0x190] sm:$0xff]
    %v361 = vld [vmem:[#allocation3 + $0x198] sm:$0xff]
    %v362 = vld [vmem:[#allocation3 + $0x1a0] sm:$0xff]
    %v363 = vld [vmem:[#allocation3 + $0x1a8] sm:$0xff]
    %v364 = vld [vmem:[#allocation3 + $0x1b0] sm:$0xff]
    %v365 = vld [vmem:[#allocation3 + $0x1b8] sm:$0xff]
    %v366 = vld [vmem:[#allocation3 + $0x1c0] sm:$0xff]
    %v367 = vld [vmem:[#allocation3 + $0x1c8] sm:$0xff]
    %v368 = vld [vmem:[#allocation3 + $0x1d0] sm:$0xff]
    %v369 = vld [vmem:[#allocation3 + $0x1d8] sm:$0xff]
    %v370 = vld [vmem:[#allocation3 + $0x1e0] sm:$0xff]
    %v371 = vld [vmem:[#allocation3 + $0x1e8] sm:$0xff]
    %v372 = vld [vmem:[#allocation3 + $0x1f0] sm:$0xff]
    %v373 = vld [vmem:[#allocation3 + $0x1f8] sm:$0xff]
    %374 = vmatprep.subr.mxu0 %v371
    %375 = vmatpush1.msra.mxu0 %v370
    %376 = vmatprep.subr.mxu0 %v367
    %377 = vmatpush1.msra.mxu0 %v366
    %378 = vmatprep.subr.mxu0 %v363
    %379 = vmatpush1.msra.mxu0 %v362
    %380 = vmatprep.subr.mxu0 %v359
    %381 = vmatpush1.msra.mxu0 %v358
    %382 = vmatprep.subr.mxu0 %v355
    %383 = vmatpush1.msra.mxu0 %v354
    %384 = vmatprep.subr.mxu0 %v351
    %385 = vmatpush1.msra.mxu0 %v350
    %386 = vmatprep.subr.mxu0 %v347
    %387 = vmatpush1.msra.mxu0 %v346
    %388 = vmatprep.subr.mxu0 %v343
    %389 = vmatpush1.msra.mxu0 %v342
    %390 = vmatprep.subr.mxu0 %v339
    %391 = vmatpush1.msra.mxu0 %v338
    %392 = vmatprep.subr.mxu0 %v335
    %393 = vmatpush1.msra.mxu0 %v334
    %394 = vmatprep.subr.mxu0 %v331
    %395 = vmatpush1.msra.mxu0 %v330
    %396 = vmatprep.subr.mxu0 %v327
    %397 = vmatpush1.msra.mxu0 %v326
    %398 = vmatprep.subr.mxu0 %v323
    %399 = vmatpush1.msra.mxu0 %v322
    %400 = vmatprep.subr.mxu0 %v319
    %401 = vmatpush1.msra.mxu0 %v318
    %402 = vmatprep.subr.mxu0 %v315
    %403 = vmatpush1.msra.mxu0 %v314
    %404 = vmatprep.subr.mxu0 %v311
    %405 = vmatpush1.msra.mxu0 %v310
    %406 = vmatprep.subr.mxu0 0.0
    %407 = vmatpush2.msra.mxu0 0.0
    %408 = vmatprep.subr.mxu0 0.0
    %409 = vmatpush2.msra.mxu0 0.0
    %410 = vmatprep.subr.mxu0 0.0
    %411 = vmatpush2.msra.mxu0 0.0
    %412 = vmatprep.subr.mxu0 0.0
    %413 = vmatpush2.msra.mxu0 0.0
    %414 = vmatprep.subr.mxu0 0.0
    %415 = vmatpush2.msra.mxu0 0.0
    %416 = vmatprep.subr.mxu0 0.0
    %417 = vmatpush2.msra.mxu0 0.0
    %418 = vmatprep.subr.mxu0 0.0
    %419 = vmatpush2.msra.mxu0 0.0
    %420 = vmatprep.subr.mxu0 0.0
    %421 = vmatpush2.msra.mxu0 0.0
    %422 = vmatprep.subr.mxu0 0.0
    %423 = vmatpush2.msra.mxu0 0.0
    %424 = vmatprep.subr.mxu0 0.0
    %425 = vmatpush2.msra.mxu0 0.0
    %426 = vmatprep.subr.mxu0 0.0
    %427 = vmatpush2.msra.mxu0 0.0
    %428 = vmatprep.subr.mxu0 0.0
    %429 = vmatpush2.msra.mxu0 0.0
    %430 = vmatprep.subr.mxu0 0.0
    %431 = vmatpush2.msra.mxu0 0.0
    %432 = vmatprep.subr.mxu0 0.0
    %433 = vmatpush2.msra.mxu0 0.0
    %434 = vmatprep.subr.mxu0 0.0
    %435 = vmatpush2.msra.mxu0 0.0
    %436 = vmatprep.subr.mxu0 0.0
    %437 = vmatpush2.msra.mxu0 0.0
    %438 = vmatprep.mubr.f32.mxu0 0.0
    %439 = vmatmul.mubr.f32.gmra.mxu0 0.0
    %v440 = vpop.f32.mrf.mxu0
    %v441 = vadd.f32 0.0, %v440
    %v442 = vpop.f32.mrf.mxu0
    %v443 = vadd.f32 0.0, %v442
    %444 = vdwg.mxu0
    %445 = vmatprep.subr.mxu0 %v373
    %446 = vmatpush1.msra.mxu0 %v372
    %447 = vmatprep.subr.mxu0 %v369
    %448 = vmatpush1.msra.mxu0 %v368
    %449 = vmatprep.subr.mxu0 %v365
    %450 = vmatpush1.msra.mxu0 %v364
    %451 = vmatprep.subr.mxu0 %v361
    %452 = vmatpush1.msra.mxu0 %v360
    %453 = vmatprep.subr.mxu0 %v357
    %454 = vmatpush1.msra.mxu0 %v356
    %455 = vmatprep.subr.mxu0 %v353
    %456 = vmatpush1.msra.mxu0 %v352
    %457 = vmatprep.subr.mxu0 %v349
    %458 = vmatpush1.msra.mxu0 %v348
    %459 = vmatprep.subr.mxu0 %v345
    %460 = vmatpush1.msra.mxu0 %v344
    %461 = vmatprep.subr.mxu0 %v341
    %462 = vmatpush1.msra.mxu0 %v340
    %463 = vmatprep.subr.mxu0 %v337
    %464 = vmatpush1.msra.mxu0 %v336
    %465 = vmatprep.subr.mxu0 %v333
    %466 = vmatpush1.msra.mxu0 %v332
    %467 = vmatprep.subr.mxu0 %v329
    %468 = vmatpush1.msra.mxu0 %v328
    %469 = vmatprep.subr.mxu0 %v325
    %470 = vmatpush1.msra.mxu0 %v324
    %471 = vmatprep.subr.mxu0 %v321
    %472 = vmatpush1.msra.mxu0 %v320
    %473 = vmatprep.subr.mxu0 %v317
    %474 = vmatpush1.msra.mxu0 %v316
    %475 = vmatprep.subr.mxu0 %v313
    %476 = vmatpush1.msra.mxu0 %v312
    %477 = vmatprep.subr.mxu0 0.0
    %478 = vmatpush2.msra.mxu0 0.0
    %479 = vmatprep.subr.mxu0 0.0
    %480 = vmatpush2.msra.mxu0 0.0
    %481 = vmatprep.subr.mxu0 0.0
    %482 = vmatpush2.msra.mxu0 0.0
    %483 = vmatprep.subr.mxu0 0.0
    %484 = vmatpush2.msra.mxu0 0.0
    %485 = vmatprep.subr.mxu0 0.0
    %486 = vmatpush2.msra.mxu0 0.0
    %487 = vmatprep.subr.mxu0 0.0
    %488 = vmatpush2.msra.mxu0 0.0
    %489 = vmatprep.subr.mxu0 0.0
    %490 = vmatpush2.msra.mxu0 0.0
    %491 = vmatprep.subr.mxu0 0.0
    %492 = vmatpush2.msra.mxu0 0.0
    %493 = vmatprep.subr.mxu0 0.0
    %494 = vmatpush2.msra.mxu0 0.0
    %495 = vmatprep.subr.mxu0 0.0
    %496 = vmatpush2.msra.mxu0 0.0
    %497 = vmatprep.subr.mxu0 0.0
    %498 = vmatpush2.msra.mxu0 0.0
    %499 = vmatprep.subr.mxu0 0.0
    %500 = vmatpush2.msra.mxu0 0.0
    %501 = vmatprep.subr.mxu0 0.0
    %502 = vmatpush2.msra.mxu0 0.0
    %503 = vmatprep.subr.mxu0 0.0
    %504 = vmatpush2.msra.mxu0 0.0
    %505 = vmatprep.subr.mxu0 0.0
    %506 = vmatpush2.msra.mxu0 0.0
    %507 = vmatprep.subr.mxu0 0.0
    %508 = vmatpush2.msra.mxu0 0.0
    %509 = vmatprep.mubr.f32.mxu0 0.0
    %510 = vmatmul.mubr.f32.gmra.mxu0 0.0
    %v511 = vpop.f32.mrf.mxu0
    %v512 = vadd.f32 0.0, %v511
    %v513 = vpop.f32.mrf.mxu0
    %v514 = vadd.f32 0.0, %v513
    %515 = vdwg.mxu0
    %v516 = vadd.f32 %v306, %v441
    %v517 = vadd.f32 %v307, %v443
    %v518 = vadd.f32 %v308, %v512
    %v519 = vadd.f32 %v309, %v514
    %v520 = vxor.u32 %v516, 2147483648
    %v521 = vmul.f32 %v520, 1.442695
    %v522 = vpow.pop %v521
    %v523 = vadd.f32 %v522, 1.0
    %v524 = vrcp.pop %v523
    %v525 = vmul.f32 1.0, %v524
    %v526 = vxor.u32 %v517, 2147483648
    %v527 = vmul.f32 %v526, 1.442695
    %v528 = vpow.pop %v527
    %v529 = vadd.f32 %v528, 1.0
    %v530 = vrcp.pop %v529
    %v531 = vmul.f32 1.0, %v530
    %v532 = vtanh.pop %v518
    %v533 = vxor.u32 %v519, 2147483648
    %v534 = vmul.f32 %v533, 1.442695
    %v535 = vpow.pop %v534
    %v536 = vadd.f32 %v535, 1.0
    %v537 = vrcp.pop %v536
    %v538 = vmul.f32 1.0, %v537
    %v539 = vmul.f32 %v531, 0.0
    %v540 = vmul.f32 %v525, %v532
    %v541 = vadd.f32 %v539, %v540
    %v542 = vtanh.pop %v541
    %v543 = vmul.f32 %v538, %v542
    %v544 = vld [vmem:[#allocation2] sm:$0xc]
    %v545 = vld [vmem:[#allocation2 + $0x8] sm:$0xc]
    %v546 = vld [vmem:[#allocation2 + $0x10] sm:$0xc]
    %v547 = vld [vmem:[#allocation2 + $0x18] sm:$0xc]
    %548 = vmatprep.subr.mxu0 %v371
    %549 = vmatpush1.msra.mxu0 %v370
    %550 = vmatprep.subr.mxu0 %v367
    %551 = vmatpush1.msra.mxu0 %v366
    %552 = vmatprep.subr.mxu0 %v363
    %553 = vmatpush1.msra.mxu0 %v362
    %554 = vmatprep.subr.mxu0 %v359
    %555 = vmatpush1.msra.mxu0 %v358
    %556 = vmatprep.subr.mxu0 %v355
    %557 = vmatpush1.msra.mxu0 %v354
    %558 = vmatprep.subr.mxu0 %v351
    %559 = vmatpush1.msra.mxu0 %v350
    %560 = vmatprep.subr.mxu0 %v347
    %561 = vmatpush1.msra.mxu0 %v346
    %562 = vmatprep.subr.mxu0 %v343
    %563 = vmatpush1.msra.mxu0 %v342
    %564 = vmatprep.subr.mxu0 %v339
    %565 = vmatpush1.msra.mxu0 %v338
    %566 = vmatprep.subr.mxu0 %v335
    %567 = vmatpush1.msra.mxu0 %v334
    %568 = vmatprep.subr.mxu0 %v331
    %569 = vmatpush1.msra.mxu0 %v330
    %570 = vmatprep.subr.mxu0 %v327
    %571 = vmatpush1.msra.mxu0 %v326
    %572 = vmatprep.subr.mxu0 %v323
    %573 = vmatpush1.msra.mxu0 %v322
    %574 = vmatprep.subr.mxu0 %v319
    %575 = vmatpush1.msra.mxu0 %v318
    %576 = vmatprep.subr.mxu0 %v315
    %577 = vmatpush1.msra.mxu0 %v314
    %578 = vmatprep.subr.mxu0 %v311
    %579 = vmatpush1.msra.mxu0 %v310
    %580 = vmatprep.subr.mxu0 0.0
    %581 = vmatpush2.msra.mxu0 0.0
    %582 = vmatprep.subr.mxu0 0.0
    %583 = vmatpush2.msra.mxu0 0.0
    %584 = vmatprep.subr.mxu0 0.0
    %585 = vmatpush2.msra.mxu0 0.0
    %586 = vmatprep.subr.mxu0 0.0
    %587 = vmatpush2.msra.mxu0 0.0
    %588 = vmatprep.subr.mxu0 0.0
    %589 = vmatpush2.msra.mxu0 0.0
    %590 = vmatprep.subr.mxu0 0.0
    %591 = vmatpush2.msra.mxu0 0.0
    %592 = vmatprep.subr.mxu0 0.0
    %593 = vmatpush2.msra.mxu0 0.0
    %594 = vmatprep.subr.mxu0 0.0
    %595 = vmatpush2.msra.mxu0 0.0
    %596 = vmatprep.subr.mxu0 0.0
    %597 = vmatpush2.msra.mxu0 0.0
    %598 = vmatprep.subr.mxu0 0.0
    %599 = vmatpush2.msra.mxu0 0.0
    %600 = vmatprep.subr.mxu0 0.0
    %601 = vmatpush2.msra.mxu0 0.0
    %602 = vmatprep.subr.mxu0 0.0
    %603 = vmatpush2.msra.mxu0 0.0
    %604 = vmatprep.subr.mxu0 0.0
    %605 = vmatpush2.msra.mxu0 0.0
    %606 = vmatprep.subr.mxu0 0.0
    %607 = vmatpush2.msra.mxu0 0.0
    %608 = vmatprep.subr.mxu0 0.0
    %609 = vmatpush2.msra.mxu0 0.0
    %610 = vmatprep.subr.mxu0 0.0
    %611 = vmatpush2.msra.mxu0 0.0
    %612 = vmatprep.mubr.f32.mxu0 0.0
    %613 = vmatmul.mubr.f32.gmra.mxu0 %v543
    %v614 = vpop.f32.mrf.mxu0
    %v615 = vadd.f32 0.0, %v614
    %v616 = vpop.f32.mrf.mxu0
    %v617 = vadd.f32 0.0, %v616
    %618 = vdwg.mxu0
    %619 = vmatprep.subr.mxu0 %v373
    %620 = vmatpush1.msra.mxu0 %v372
    %621 = vmatprep.subr.mxu0 %v369
    %622 = vmatpush1.msra.mxu0 %v368
    %623 = vmatprep.subr.mxu0 %v365
    %624 = vmatpush1.msra.mxu0 %v364
    %625 = vmatprep.subr.mxu0 %v361
    %626 = vmatpush1.msra.mxu0 %v360
    %627 = vmatprep.subr.mxu0 %v357
    %628 = vmatpush1.msra.mxu0 %v356
    %629 = vmatprep.subr.mxu0 %v353
    %630 = vmatpush1.msra.mxu0 %v352
    %631 = vmatprep.subr.mxu0 %v349
    %632 = vmatpush1.msra.mxu0 %v348
    %633 = vmatprep.subr.mxu0 %v345
    %634 = vmatpush1.msra.mxu0 %v344
    %635 = vmatprep.subr.mxu0 %v341
    %636 = vmatpush1.msra.mxu0 %v340
    %637 = vmatprep.subr.mxu0 %v337
    %638 = vmatpush1.msra.mxu0 %v336
    %639 = vmatprep.subr.mxu0 %v333
    %640 = vmatpush1.msra.mxu0 %v332
    %641 = vmatprep.subr.mxu0 %v329
    %642 = vmatpush1.msra.mxu0 %v328
    %643 = vmatprep.subr.mxu0 %v325
    %644 = vmatpush1.msra.mxu0 %v324
    %645 = vmatprep.subr.mxu0 %v321
    %646 = vmatpush1.msra.mxu0 %v320
    %647 = vmatprep.subr.mxu0 %v317
    %648 = vmatpush1.msra.mxu0 %v316
    %649 = vmatprep.subr.mxu0 %v313
    %650 = vmatpush1.msra.mxu0 %v312
    %651 = vmatprep.subr.mxu0 0.0
    %652 = vmatpush2.msra.mxu0 0.0
    %653 = vmatprep.subr.mxu0 0.0
    %654 = vmatpush2.msra.mxu0 0.0
    %655 = vmatprep.subr.mxu0 0.0
    %656 = vmatpush2.msra.mxu0 0.0
    %657 = vmatprep.subr.mxu0 0.0
    %658 = vmatpush2.msra.mxu0 0.0
    %659 = vmatprep.subr.mxu0 0.0
    %660 = vmatpush2.msra.mxu0 0.0
    %661 = vmatprep.subr.mxu0 0.0
    %662 = vmatpush2.msra.mxu0 0.0
    %663 = vmatprep.subr.mxu0 0.0
    %664 = vmatpush2.msra.mxu0 0.0
    %665 = vmatprep.subr.mxu0 0.0
    %666 = vmatpush2.msra.mxu0 0.0
    %667 = vmatprep.subr.mxu0 0.0
    %668 = vmatpush2.msra.mxu0 0.0
    %669 = vmatprep.subr.mxu0 0.0
    %670 = vmatpush2.msra.mxu0 0.0
    %671 = vmatprep.subr.mxu0 0.0
    %672 = vmatpush2.msra.mxu0 0.0
    %673 = vmatprep.subr.mxu0 0.0
    %674 = vmatpush2.msra.mxu0 0.0
    %675 = vmatprep.subr.mxu0 0.0
    %676 = vmatpush2.msra.mxu0 0.0
    %677 = vmatprep.subr.mxu0 0.0
    %678 = vmatpush2.msra.mxu0 0.0
    %679 = vmatprep.subr.mxu0 0.0
    %680 = vmatpush2.msra.mxu0 0.0
    %681 = vmatprep.subr.mxu0 0.0
    %682 = vmatpush2.msra.mxu0 0.0
    %683 = vmatprep.mubr.f32.mxu0 0.0
    %684 = vmatmul.mubr.f32.gmra.mxu0 %v543
    %v685 = vpop.f32.mrf.mxu0
    %v686 = vadd.f32 0.0, %v685
    %v687 = vpop.f32.mrf.mxu0
    %v688 = vadd.f32 0.0, %v687
    %689 = vdwg.mxu0
    %v694 = vrot.slane %v615, 6
    %v695 = vrot.slane %v617, 6
    %v696 = vrot.slane %v686, 6
    %v697 = vrot.slane %v688, 6
    %v702 = vadd.f32 %v544, %v694
    %v703 = vadd.f32 %v545, %v695
    %v704 = vadd.f32 %v546, %v696
    %v705 = vadd.f32 %v547, %v697
    %v706 = vxor.u32 %v702, 2147483648
    %v707 = vmul.f32 %v706, 1.442695
    %v708 = vpow.pop %v707
    %v709 = vadd.f32 %v708, 1.0
    %v710 = vrcp.pop %v709
    %v711 = vmul.f32 1.0, %v710
    %v712 = vxor.u32 %v703, 2147483648
    %v713 = vmul.f32 %v712, 1.442695
    %v714 = vpow.pop %v713
    %v715 = vadd.f32 %v714, 1.0
    %v716 = vrcp.pop %v715
    %v717 = vmul.f32 1.0, %v716
    %v718 = vtanh.pop %v704
    %v719 = vxor.u32 %v705, 2147483648
    %v720 = vmul.f32 %v719, 1.442695
    %v721 = vpow.pop %v720
    %v722 = vadd.f32 %v721, 1.0
    %v723 = vrcp.pop %v722
    %v724 = vmul.f32 1.0, %v723
    %v726 = vrot.slane %v541, 6
    %v728 = vmul.f32 %v717, %v726
    %v729 = vmul.f32 %v711, %v718
    %v730 = vadd.f32 %v728, %v729
    %v731 = vtanh.pop %v730
    %v732 = vmul.f32 %v724, %v731
    %v733 = vld [vmem:[#allocation2] sm:$0x30]
    %v734 = vld [vmem:[#allocation2 + $0x8] sm:$0x30]
    %v735 = vld [vmem:[#allocation2 + $0x10] sm:$0x30]
    %v736 = vld [vmem:[#allocation2 + $0x18] sm:$0x30]
    %v738 = vrot.slane %v732, 2
    %740 = vmatprep.subr.mxu0 %v371
    %741 = vmatpush1.msra.mxu0 %v370
    %742 = vmatprep.subr.mxu0 %v367
    %743 = vmatpush1.msra.mxu0 %v366
    %744 = vmatprep.subr.mxu0 %v363
    %745 = vmatpush1.msra.mxu0 %v362
    %746 = vmatprep.subr.mxu0 %v359
    %747 = vmatpush1.msra.mxu0 %v358
    %748 = vmatprep.subr.mxu0 %v355
    %749 = vmatpush1.msra.mxu0 %v354
    %750 = vmatprep.subr.mxu0 %v351
    %751 = vmatpush1.msra.mxu0 %v350
    %752 = vmatprep.subr.mxu0 %v347
    %753 = vmatpush1.msra.mxu0 %v346
    %754 = vmatprep.subr.mxu0 %v343
    %755 = vmatpush1.msra.mxu0 %v342
    %756 = vmatprep.subr.mxu0 %v339
    %757 = vmatpush1.msra.mxu0 %v338
    %758 = vmatprep.subr.mxu0 %v335
    %759 = vmatpush1.msra.mxu0 %v334
    %760 = vmatprep.subr.mxu0 %v331
    %761 = vmatpush1.msra.mxu0 %v330
    %762 = vmatprep.subr.mxu0 %v327
    %763 = vmatpush1.msra.mxu0 %v326
    %764 = vmatprep.subr.mxu0 %v323
    %765 = vmatpush1.msra.mxu0 %v322
    %766 = vmatprep.subr.mxu0 %v319
    %767 = vmatpush1.msra.mxu0 %v318
    %768 = vmatprep.subr.mxu0 %v315
    %769 = vmatpush1.msra.mxu0 %v314
    %770 = vmatprep.subr.mxu0 %v311
    %771 = vmatpush1.msra.mxu0 %v310
    %772 = vmatprep.subr.mxu0 0.0
    %773 = vmatpush2.msra.mxu0 0.0
    %774 = vmatprep.subr.mxu0 0.0
    %775 = vmatpush2.msra.mxu0 0.0
    %776 = vmatprep.subr.mxu0 0.0
    %777 = vmatpush2.msra.mxu0 0.0
    %778 = vmatprep.subr.mxu0 0.0
    %779 = vmatpush2.msra.mxu0 0.0
    %780 = vmatprep.subr.mxu0 0.0
    %781 = vmatpush2.msra.mxu0 0.0
    %782 = vmatprep.subr.mxu0 0.0
    %783 = vmatpush2.msra.mxu0 0.0
    %784 = vmatprep.subr.mxu0 0.0
    %785 = vmatpush2.msra.mxu0 0.0
    %786 = vmatprep.subr.mxu0 0.0
    %787 = vmatpush2.msra.mxu0 0.0
    %788 = vmatprep.subr.mxu0 0.0
    %789 = vmatpush2.msra.mxu0 0.0
    %790 = vmatprep.subr.mxu0 0.0
    %791 = vmatpush2.msra.mxu0 0.0
    %792 = vmatprep.subr.mxu0 0.0
    %793 = vmatpush2.msra.mxu0 0.0
    %794 = vmatprep.subr.mxu0 0.0
    %795 = vmatpush2.msra.mxu0 0.0
    %796 = vmatprep.subr.mxu0 0.0
    %797 = vmatpush2.msra.mxu0 0.0
    %798 = vmatprep.subr.mxu0 0.0
    %799 = vmatpush2.msra.mxu0 0.0
    %800 = vmatprep.subr.mxu0 0.0
    %801 = vmatpush2.msra.mxu0 0.0
    %802 = vmatprep.subr.mxu0 0.0
    %803 = vmatpush2.msra.mxu0 0.0
    %804 = vmatprep.mubr.f32.mxu0 0.0
    %805 = vmatmul.mubr.f32.gmra.mxu0 %v738
    %v806 = vpop.f32.mrf.mxu0
    %v807 = vadd.f32 0.0, %v806
    %v808 = vpop.f32.mrf.mxu0
    %v809 = vadd.f32 0.0, %v808
    %810 = vdwg.mxu0
    %811 = vmatprep.subr.mxu0 %v373
    %812 = vmatpush1.msra.mxu0 %v372
    %813 = vmatprep.subr.mxu0 %v369
    %814 = vmatpush1.msra.mxu0 %v368
    %815 = vmatprep.subr.mxu0 %v365
    %816 = vmatpush1.msra.mxu0 %v364
    %817 = vmatprep.subr.mxu0 %v361
    %818 = vmatpush1.msra.mxu0 %v360
    %819 = vmatprep.subr.mxu0 %v357
    %820 = vmatpush1.msra.mxu0 %v356
    %821 = vmatprep.subr.mxu0 %v353
    %822 = vmatpush1.msra.mxu0 %v352
    %823 = vmatprep.subr.mxu0 %v349
    %824 = vmatpush1.msra.mxu0 %v348
    %825 = vmatprep.subr.mxu0 %v345
    %826 = vmatpush1.msra.mxu0 %v344
    %827 = vmatprep.subr.mxu0 %v341
    %828 = vmatpush1.msra.mxu0 %v340
    %829 = vmatprep.subr.mxu0 %v337
    %830 = vmatpush1.msra.mxu0 %v336
    %831 = vmatprep.subr.mxu0 %v333
    %832 = vmatpush1.msra.mxu0 %v332
    %833 = vmatprep.subr.mxu0 %v329
    %834 = vmatpush1.msra.mxu0 %v328
    %835 = vmatprep.subr.mxu0 %v325
    %836 = vmatpush1.msra.mxu0 %v324
    %837 = vmatprep.subr.mxu0 %v321
    %838 = vmatpush1.msra.mxu0 %v320
    %839 = vmatprep.subr.mxu0 %v317
    %840 = vmatpush1.msra.mxu0 %v316
    %841 = vmatprep.subr.mxu0 %v313
    %842 = vmatpush1.msra.mxu0 %v312
    %843 = vmatprep.subr.mxu0 0.0
    %844 = vmatpush2.msra.mxu0 0.0
    %845 = vmatprep.subr.mxu0 0.0
    %846 = vmatpush2.msra.mxu0 0.0
    %847 = vmatprep.subr.mxu0 0.0
    %848 = vmatpush2.msra.mxu0 0.0
    %849 = vmatprep.subr.mxu0 0.0
    %850 = vmatpush2.msra.mxu0 0.0
    %851 = vmatprep.subr.mxu0 0.0
    %852 = vmatpush2.msra.mxu0 0.0
    %853 = vmatprep.subr.mxu0 0.0
    %854 = vmatpush2.msra.mxu0 0.0
    %855 = vmatprep.subr.mxu0 0.0
    %856 = vmatpush2.msra.mxu0 0.0
    %857 = vmatprep.subr.mxu0 0.0
    %858 = vmatpush2.msra.mxu0 0.0
    %859 = vmatprep.subr.mxu0 0.0
    %860 = vmatpush2.msra.mxu0 0.0
    %861 = vmatprep.subr.mxu0 0.0
    %862 = vmatpush2.msra.mxu0 0.0
    %863 = vmatprep.subr.mxu0 0.0
    %864 = vmatpush2.msra.mxu0 0.0
    %865 = vmatprep.subr.mxu0 0.0
    %866 = vmatpush2.msra.mxu0 0.0
    %867 = vmatprep.subr.mxu0 0.0
    %868 = vmatpush2.msra.mxu0 0.0
    %869 = vmatprep.subr.mxu0 0.0
    %870 = vmatpush2.msra.mxu0 0.0
    %871 = vmatprep.subr.mxu0 0.0
    %872 = vmatpush2.msra.mxu0 0.0
    %873 = vmatprep.subr.mxu0 0.0
    %874 = vmatpush2.msra.mxu0 0.0
    %875 = vmatprep.mubr.f32.mxu0 0.0
    %876 = vmatmul.mubr.f32.gmra.mxu0 %v738
    %v877 = vpop.f32.mrf.mxu0
    %v878 = vadd.f32 0.0, %v877
    %v879 = vpop.f32.mrf.mxu0
    %v880 = vadd.f32 0.0, %v879
    %881 = vdwg.mxu0
    %v886 = vrot.slane %v807, 4
    %v887 = vrot.slane %v809, 4
    %v888 = vrot.slane %v878, 4
    %v889 = vrot.slane %v880, 4
    %v894 = vadd.f32 %v733, %v886
    %v895 = vadd.f32 %v734, %v887
    %v896 = vadd.f32 %v735, %v888
    %v897 = vadd.f32 %v736, %v889
    %v898 = vxor.u32 %v894, 2147483648
    %v899 = vmul.f32 %v898, 1.442695
    %v900 = vpow.pop %v899
    %v901 = vadd.f32 %v900, 1.0
    %v902 = vrcp.pop %v901
    %v903 = vmul.f32 1.0, %v902
    %v904 = vxor.u32 %v895, 2147483648
    %v905 = vmul.f32 %v904, 1.442695
    %v906 = vpow.pop %v905
    %v907 = vadd.f32 %v906, 1.0
    %v908 = vrcp.pop %v907
    %v909 = vmul.f32 1.0, %v908
    %v910 = vtanh.pop %v896
    %v911 = vxor.u32 %v897, 2147483648
    %v912 = vmul.f32 %v911, 1.442695
    %v913 = vpow.pop %v912
    %v914 = vadd.f32 %v913, 1.0
    %v915 = vrcp.pop %v914
    %v916 = vmul.f32 1.0, %v915
    %v918 = vrot.slane %v730, 6
    %v920 = vmul.f32 %v909, %v918
    %v921 = vmul.f32 %v903, %v910
    %v922 = vadd.f32 %v920, %v921
    %v923 = vtanh.pop %v922
    %v924 = vmul.f32 %v916, %v923
    %v925 = vld [vmem:[#allocation2] sm:$0xc0]
    %v926 = vld [vmem:[#allocation2 + $0x8] sm:$0xc0]
    %v927 = vld [vmem:[#allocation2 + $0x10] sm:$0xc0]
    %v928 = vld [vmem:[#allocation2 + $0x18] sm:$0xc0]
    %v930 = vrot.slane %v924, 4
    %932 = vmatprep.subr.mxu0 %v371
    %933 = vmatpush1.msra.mxu0 %v370
    %934 = vmatprep.subr.mxu0 %v367
    %935 = vmatpush1.msra.mxu0 %v366
    %936 = vmatprep.subr.mxu0 %v363
    %937 = vmatpush1.msra.mxu0 %v362
    %938 = vmatprep.subr.mxu0 %v359
    %939 = vmatpush1.msra.mxu0 %v358
    %940 = vmatprep.subr.mxu0 %v355
    %941 = vmatpush1.msra.mxu0 %v354
    %942 = vmatprep.subr.mxu0 %v351
    %943 = vmatpush1.msra.mxu0 %v350
    %944 = vmatprep.subr.mxu0 %v347
    %945 = vmatpush1.msra.mxu0 %v346
    %946 = vmatprep.subr.mxu0 %v343
    %947 = vmatpush1.msra.mxu0 %v342
    %948 = vmatprep.subr.mxu0 %v339
    %949 = vmatpush1.msra.mxu0 %v338
    %950 = vmatprep.subr.mxu0 %v335
    %951 = vmatpush1.msra.mxu0 %v334
    %952 = vmatprep.subr.mxu0 %v331
    %953 = vmatpush1.msra.mxu0 %v330
    %954 = vmatprep.subr.mxu0 %v327
    %955 = vmatpush1.msra.mxu0 %v326
    %956 = vmatprep.subr.mxu0 %v323
    %957 = vmatpush1.msra.mxu0 %v322
    %958 = vmatprep.subr.mxu0 %v319
    %959 = vmatpush1.msra.mxu0 %v318
    %960 = vmatprep.subr.mxu0 %v315
    %961 = vmatpush1.msra.mxu0 %v314
    %962 = vmatprep.subr.mxu0 %v311
    %963 = vmatpush1.msra.mxu0 %v310
    %964 = vmatprep.subr.mxu0 0.0
    %965 = vmatpush2.msra.mxu0 0.0
    %966 = vmatprep.subr.mxu0 0.0
    %967 = vmatpush2.msra.mxu0 0.0
    %968 = vmatprep.subr.mxu0 0.0
    %969 = vmatpush2.msra.mxu0 0.0
    %970 = vmatprep.subr.mxu0 0.0
    %971 = vmatpush2.msra.mxu0 0.0
    %972 = vmatprep.subr.mxu0 0.0
    %973 = vmatpush2.msra.mxu0 0.0
    %974 = vmatprep.subr.mxu0 0.0
    %975 = vmatpush2.msra.mxu0 0.0
    %976 = vmatprep.subr.mxu0 0.0
    %977 = vmatpush2.msra.mxu0 0.0
    %978 = vmatprep.subr.mxu0 0.0
    %979 = vmatpush2.msra.mxu0 0.0
    %980 = vmatprep.subr.mxu0 0.0
    %981 = vmatpush2.msra.mxu0 0.0
    %982 = vmatprep.subr.mxu0 0.0
    %983 = vmatpush2.msra.mxu0 0.0
    %984 = vmatprep.subr.mxu0 0.0
    %985 = vmatpush2.msra.mxu0 0.0
    %986 = vmatprep.subr.mxu0 0.0
    %987 = vmatpush2.msra.mxu0 0.0
    %988 = vmatprep.subr.mxu0 0.0
    %989 = vmatpush2.msra.mxu0 0.0
    %990 = vmatprep.subr.mxu0 0.0
    %991 = vmatpush2.msra.mxu0 0.0
    %992 = vmatprep.subr.mxu0 0.0
    %993 = vmatpush2.msra.mxu0 0.0
    %994 = vmatprep.subr.mxu0 0.0
    %995 = vmatpush2.msra.mxu0 0.0
    %996 = vmatprep.mubr.f32.mxu0 0.0
    %997 = vmatmul.mubr.f32.gmra.mxu0 %v930
    %v998 = vpop.f32.mrf.mxu0
    %v999 = vadd.f32 0.0, %v998
    %v1000 = vpop.f32.mrf.mxu0
    %v1001 = vadd.f32 0.0, %v1000
    %1002 = vdwg.mxu0
    %1003 = vmatprep.subr.mxu0 %v373
    %1004 = vmatpush1.msra.mxu0 %v372
    %1005 = vmatprep.subr.mxu0 %v369
    %1006 = vmatpush1.msra.mxu0 %v368
    %1007 = vmatprep.subr.mxu0 %v365
    %1008 = vmatpush1.msra.mxu0 %v364
    %1009 = vmatprep.subr.mxu0 %v361
    %1010 = vmatpush1.msra.mxu0 %v360
    %1011 = vmatprep.subr.mxu0 %v357
    %1012 = vmatpush1.msra.mxu0 %v356
    %1013 = vmatprep.subr.mxu0 %v353
    %1014 = vmatpush1.msra.mxu0 %v352
    %1015 = vmatprep.subr.mxu0 %v349
    %1016 = vmatpush1.msra.mxu0 %v348
    %1017 = vmatprep.subr.mxu0 %v345
    %1018 = vmatpush1.msra.mxu0 %v344
    %1019 = vmatprep.subr.mxu0 %v341
    %1020 = vmatpush1.msra.mxu0 %v340
    %1021 = vmatprep.subr.mxu0 %v337
    %1022 = vmatpush1.msra.mxu0 %v336
    %1023 = vmatprep.subr.mxu0 %v333
    %1024 = vmatpush1.msra.mxu0 %v332
    %1025 = vmatprep.subr.mxu0 %v329
    %1026 = vmatpush1.msra.mxu0 %v328
    %1027 = vmatprep.subr.mxu0 %v325
    %1028 = vmatpush1.msra.mxu0 %v324
    %1029 = vmatprep.subr.mxu0 %v321
    %1030 = vmatpush1.msra.mxu0 %v320
    %1031 = vmatprep.subr.mxu0 %v317
    %1032 = vmatpush1.msra.mxu0 %v316
    %1033 = vmatprep.subr.mxu0 %v313
    %1034 = vmatpush1.msra.mxu0 %v312
    %1035 = vmatprep.subr.mxu0 0.0
    %1036 = vmatpush2.msra.mxu0 0.0
    %1037 = vmatprep.subr.mxu0 0.0
    %1038 = vmatpush2.msra.mxu0 0.0
    %1039 = vmatprep.subr.mxu0 0.0
    %1040 = vmatpush2.msra.mxu0 0.0
    %1041 = vmatprep.subr.mxu0 0.0
    %1042 = vmatpush2.msra.mxu0 0.0
    %1043 = vmatprep.subr.mxu0 0.0
    %1044 = vmatpush2.msra.mxu0 0.0
    %1045 = vmatprep.subr.mxu0 0.0
    %1046 = vmatpush2.msra.mxu0 0.0
    %1047 = vmatprep.subr.mxu0 0.0
    %1048 = vmatpush2.msra.mxu0 0.0
    %1049 = vmatprep.subr.mxu0 0.0
    %1050 = vmatpush2.msra.mxu0 0.0
    %1051 = vmatprep.subr.mxu0 0.0
    %1052 = vmatpush2.msra.mxu0 0.0
    %1053 = vmatprep.subr.mxu0 0.0
    %1054 = vmatpush2.msra.mxu0 0.0
    %1055 = vmatprep.subr.mxu0 0.0
    %1056 = vmatpush2.msra.mxu0 0.0
    %1057 = vmatprep.subr.mxu0 0.0
    %1058 = vmatpush2.msra.mxu0 0.0
    %1059 = vmatprep.subr.mxu0 0.0
    %1060 = vmatpush2.msra.mxu0 0.0
    %1061 = vmatprep.subr.mxu0 0.0
    %1062 = vmatpush2.msra.mxu0 0.0
    %1063 = vmatprep.subr.mxu0 0.0
    %1064 = vmatpush2.msra.mxu0 0.0
    %1065 = vmatprep.subr.mxu0 0.0
    %1066 = vmatpush2.msra.mxu0 0.0
    %1067 = vmatprep.mubr.f32.mxu0 0.0
    %1068 = vmatmul.mubr.f32.gmra.mxu0 %v930
    %v1069 = vpop.f32.mrf.mxu0
    %v1070 = vadd.f32 0.0, %v1069
    %v1071 = vpop.f32.mrf.mxu0
    %v1072 = vadd.f32 0.0, %v1071
    %1073 = vdwg.mxu0
    %v1078 = vrot.slane %v999, 2
    %v1079 = vrot.slane %v1001, 2
    %v1080 = vrot.slane %v1070, 2
    %v1081 = vrot.slane %v1072, 2
    %v1086 = vadd.f32 %v925, %v1078
    %v1087 = vadd.f32 %v926, %v1079
    %v1088 = vadd.f32 %v927, %v1080
    %v1089 = vadd.f32 %v928, %v1081
    %v1090 = vxor.u32 %v1086, 2147483648
    %v1091 = vmul.f32 %v1090, 1.442695
    %v1092 = vpow.pop %v1091
    %v1093 = vadd.f32 %v1092, 1.0
    %v1094 = vrcp.pop %v1093
    %v1095 = vmul.f32 1.0, %v1094
    %v1096 = vxor.u32 %v1087, 2147483648
    %v1097 = vmul.f32 %v1096, 1.442695
    %v1098 = vpow.pop %v1097
    %v1099 = vadd.f32 %v1098, 1.0
    %v1100 = vrcp.pop %v1099
    %v1101 = vmul.f32 1.0, %v1100
    %v1102 = vtanh.pop %v1088
    %v1103 = vxor.u32 %v1089, 2147483648
    %v1104 = vmul.f32 %v1103, 1.442695
    %v1105 = vpow.pop %v1104
    %v1106 = vadd.f32 %v1105, 1.0
    %v1107 = vrcp.pop %v1106
    %v1108 = vmul.f32 1.0, %v1107
    %v1110 = vrot.slane %v922, 6
    %v1112 = vmul.f32 %v1101, %v1110
    %v1113 = vmul.f32 %v1095, %v1102
    %v1114 = vadd.f32 %v1112, %v1113
    %v1115 = vtanh.pop %v1114
    %v1116 = vmul.f32 %v1108, %v1115
    %v1117 = vld [vmem:[#allocation2 + $0x20] sm:$0x3]
    %v1118 = vld [vmem:[#allocation2 + $0x28] sm:$0x3]
    %v1119 = vld [vmem:[#allocation2 + $0x30] sm:$0x3]
    %v1120 = vld [vmem:[#allocation2 + $0x38] sm:$0x3]
    %v1122 = vrot.slane %v1116, 6
    %1124 = vmatprep.subr.mxu0 %v371
    %1125 = vmatpush1.msra.mxu0 %v370
    %1126 = vmatprep.subr.mxu0 %v367
    %1127 = vmatpush1.msra.mxu0 %v366
    %1128 = vmatprep.subr.mxu0 %v363
    %1129 = vmatpush1.msra.mxu0 %v362
    %1130 = vmatprep.subr.mxu0 %v359
    %1131 = vmatpush1.msra.mxu0 %v358
    %1132 = vmatprep.subr.mxu0 %v355
    %1133 = vmatpush1.msra.mxu0 %v354
    %1134 = vmatprep.subr.mxu0 %v351
    %1135 = vmatpush1.msra.mxu0 %v350
    %1136 = vmatprep.subr.mxu0 %v347
    %1137 = vmatpush1.msra.mxu0 %v346
    %1138 = vmatprep.subr.mxu0 %v343
    %1139 = vmatpush1.msra.mxu0 %v342
    %1140 = vmatprep.subr.mxu0 %v339
    %1141 = vmatpush1.msra.mxu0 %v338
    %1142 = vmatprep.subr.mxu0 %v335
    %1143 = vmatpush1.msra.mxu0 %v334
    %1144 = vmatprep.subr.mxu0 %v331
    %1145 = vmatpush1.msra.mxu0 %v330
    %1146 = vmatprep.subr.mxu0 %v327
    %1147 = vmatpush1.msra.mxu0 %v326
    %1148 = vmatprep.subr.mxu0 %v323
    %1149 = vmatpush1.msra.mxu0 %v322
    %1150 = vmatprep.subr.mxu0 %v319
    %1151 = vmatpush1.msra.mxu0 %v318
    %1152 = vmatprep.subr.mxu0 %v315
    %1153 = vmatpush1.msra.mxu0 %v314
    %1154 = vmatprep.subr.mxu0 %v311
    %1155 = vmatpush1.msra.mxu0 %v310
    %1156 = vmatprep.subr.mxu0 0.0
    %1157 = vmatpush2.msra.mxu0 0.0
    %1158 = vmatprep.subr.mxu0 0.0
    %1159 = vmatpush2.msra.mxu0 0.0
    %1160 = vmatprep.subr.mxu0 0.0
    %1161 = vmatpush2.msra.mxu0 0.0
    %1162 = vmatprep.subr.mxu0 0.0
    %1163 = vmatpush2.msra.mxu0 0.0
    %1164 = vmatprep.subr.mxu0 0.0
    %1165 = vmatpush2.msra.mxu0 0.0
    %1166 = vmatprep.subr.mxu0 0.0
    %1167 = vmatpush2.msra.mxu0 0.0
    %1168 = vmatprep.subr.mxu0 0.0
    %1169 = vmatpush2.msra.mxu0 0.0
    %1170 = vmatprep.subr.mxu0 0.0
    %1171 = vmatpush2.msra.mxu0 0.0
    %1172 = vmatprep.subr.mxu0 0.0
    %1173 = vmatpush2.msra.mxu0 0.0
    %1174 = vmatprep.subr.mxu0 0.0
    %1175 = vmatpush2.msra.mxu0 0.0
    %1176 = vmatprep.subr.mxu0 0.0
    %1177 = vmatpush2.msra.mxu0 0.0
    %1178 = vmatprep.subr.mxu0 0.0
    %1179 = vmatpush2.msra.mxu0 0.0
    %1180 = vmatprep.subr.mxu0 0.0
    %1181 = vmatpush2.msra.mxu0 0.0
    %1182 = vmatprep.subr.mxu0 0.0
    %1183 = vmatpush2.msra.mxu0 0.0
    %1184 = vmatprep.subr.mxu0 0.0
    %1185 = vmatpush2.msra.mxu0 0.0
    %1186 = vmatprep.subr.mxu0 0.0
    %1187 = vmatpush2.msra.mxu0 0.0
    %1188 = vmatprep.mubr.f32.mxu0 0.0
    %1189 = vmatmul.mubr.f32.gmra.mxu0 %v1122
    %v1190 = vpop.f32.mrf.mxu0
    %v1191 = vadd.f32 0.0, %v1190
    %v1192 = vpop.f32.mrf.mxu0
    %v1193 = vadd.f32 0.0, %v1192
    %1194 = vdwg.mxu0
    %1195 = vmatprep.subr.mxu0 %v373
    %1196 = vmatpush1.msra.mxu0 %v372
    %1197 = vmatprep.subr.mxu0 %v369
    %1198 = vmatpush1.msra.mxu0 %v368
    %1199 = vmatprep.subr.mxu0 %v365
    %1200 = vmatpush1.msra.mxu0 %v364
    %1201 = vmatprep.subr.mxu0 %v361
    %1202 = vmatpush1.msra.mxu0 %v360
    %1203 = vmatprep.subr.mxu0 %v357
    %1204 = vmatpush1.msra.mxu0 %v356
    %1205 = vmatprep.subr.mxu0 %v353
    %1206 = vmatpush1.msra.mxu0 %v352
    %1207 = vmatprep.subr.mxu0 %v349
    %1208 = vmatpush1.msra.mxu0 %v348
    %1209 = vmatprep.subr.mxu0 %v345
    %1210 = vmatpush1.msra.mxu0 %v344
    %1211 = vmatprep.subr.mxu0 %v341
    %1212 = vmatpush1.msra.mxu0 %v340
    %1213 = vmatprep.subr.mxu0 %v337
    %1214 = vmatpush1.msra.mxu0 %v336
    %1215 = vmatprep.subr.mxu0 %v333
    %1216 = vmatpush1.msra.mxu0 %v332
    %1217 = vmatprep.subr.mxu0 %v329
    %1218 = vmatpush1.msra.mxu0 %v328
    %1219 = vmatprep.subr.mxu0 %v325
    %1220 = vmatpush1.msra.mxu0 %v324
    %1221 = vmatprep.subr.mxu0 %v321
    %1222 = vmatpush1.msra.mxu0 %v320
    %1223 = vmatprep.subr.mxu0 %v317
    %1224 = vmatpush1.msra.mxu0 %v316
    %1225 = vmatprep.subr.mxu0 %v313
    %1226 = vmatpush1.msra.mxu0 %v312
    %1227 = vmatprep.subr.mxu0 0.0
    %1228 = vmatpush2.msra.mxu0 0.0
    %1229 = vmatprep.subr.mxu0 0.0
    %1230 = vmatpush2.msra.mxu0 0.0
    %1231 = vmatprep.subr.mxu0 0.0
    %1232 = vmatpush2.msra.mxu0 0.0
    %1233 = vmatprep.subr.mxu0 0.0
    %1234 = vmatpush2.msra.mxu0 0.0
    %1235 = vmatprep.subr.mxu0 0.0
    %1236 = vmatpush2.msra.mxu0 0.0
    %1237 = vmatprep.subr.mxu0 0.0
    %1238 = vmatpush2.msra.mxu0 0.0
    %1239 = vmatprep.subr.mxu0 0.0
    %1240 = vmatpush2.msra.mxu0 0.0
    %1241 = vmatprep.subr.mxu0 0.0
    %1242 = vmatpush2.msra.mxu0 0.0
    %1243 = vmatprep.subr.mxu0 0.0
    %1244 = vmatpush2.msra.mxu0 0.0
    %1245 = vmatprep.subr.mxu0 0.0
    %1246 = vmatpush2.msra.mxu0 0.0
    %1247 = vmatprep.subr.mxu0 0.0
    %1248 = vmatpush2.msra.mxu0 0.0
    %1249 = vmatprep.subr.mxu0 0.0
    %1250 = vmatpush2.msra.mxu0 0.0
    %1251 = vmatprep.subr.mxu0 0.0
    %1252 = vmatpush2.msra.mxu0 0.0
    %1253 = vmatprep.subr.mxu0 0.0
    %1254 = vmatpush2.msra.mxu0 0.0
    %1255 = vmatprep.subr.mxu0 0.0
    %1256 = vmatpush2.msra.mxu0 0.0
    %1257 = vmatprep.subr.mxu0 0.0
    %1258 = vmatpush2.msra.mxu0 0.0
    %1259 = vmatprep.mubr.f32.mxu0 0.0
    %1260 = vmatmul.mubr.f32.gmra.mxu0 %v1122
    %v1261 = vpop.f32.mrf.mxu0
    %v1262 = vadd.f32 0.0, %v1261
    %v1263 = vpop.f32.mrf.mxu0
    %v1264 = vadd.f32 0.0, %v1263
    %1265 = vdwg.mxu0
    %v1266 = vadd.f32 %v1117, %v1191
    %v1267 = vadd.f32 %v1118, %v1193
    %v1268 = vadd.f32 %v1119, %v1262
    %v1269 = vadd.f32 %v1120, %v1264
    %v1270 = vxor.u32 %v1266, 2147483648
    %v1271 = vmul.f32 %v1270, 1.442695
    %v1272 = vpow.pop %v1271
    %v1273 = vadd.f32 %v1272, 1.0
    %v1274 = vrcp.pop %v1273
    %v1275 = vmul.f32 1.0, %v1274
    %v1276 = vxor.u32 %v1267, 2147483648
    %v1277 = vmul.f32 %v1276, 1.442695
    %v1278 = vpow.pop %v1277
    %v1279 = vadd.f32 %v1278, 1.0
    %v1280 = vrcp.pop %v1279
    %v1281 = vmul.f32 1.0, %v1280
    %v1282 = vtanh.pop %v1268
    %v1283 = vxor.u32 %v1269, 2147483648
    %v1284 = vmul.f32 %v1283, 1.442695
    %v1285 = vpow.pop %v1284
    %v1286 = vadd.f32 %v1285, 1.0
    %v1287 = vrcp.pop %v1286
    %v1288 = vmul.f32 1.0, %v1287
    %v1290 = vrot.slane %v1114, 6
    %v1292 = vmul.f32 %v1281, %v1290
    %v1293 = vmul.f32 %v1275, %v1282
    %v1294 = vadd.f32 %v1292, %v1293
    %v1295 = vtanh.pop %v1294
    %v1296 = vmul.f32 %v1288, %v1295
    %v1297 = vld [vmem:[#allocation2 + $0x20] sm:$0xc]
    %v1298 = vld [vmem:[#allocation2 + $0x28] sm:$0xc]
    %v1299 = vld [vmem:[#allocation2 + $0x30] sm:$0xc]
    %v1300 = vld [vmem:[#allocation2 + $0x38] sm:$0xc]
    %1301 = vmatprep.subr.mxu0 %v371
    %1302 = vmatpush1.msra.mxu0 %v370
    %1303 = vmatprep.subr.mxu0 %v367
    %1304 = vmatpush1.msra.mxu0 %v366
    %1305 = vmatprep.subr.mxu0 %v363
    %1306 = vmatpush1.msra.mxu0 %v362
    %1307 = vmatprep.subr.mxu0 %v359
    %1308 = vmatpush1.msra.mxu0 %v358
    %1309 = vmatprep.subr.mxu0 %v355
    %1310 = vmatpush1.msra.mxu0 %v354
    %1311 = vmatprep.subr.mxu0 %v351
    %1312 = vmatpush1.msra.mxu0 %v350
    %1313 = vmatprep.subr.mxu0 %v347
    %1314 = vmatpush1.msra.mxu0 %v346
    %1315 = vmatprep.subr.mxu0 %v343
    %1316 = vmatpush1.msra.mxu0 %v342
    %1317 = vmatprep.subr.mxu0 %v339
    %1318 = vmatpush1.msra.mxu0 %v338
    %1319 = vmatprep.subr.mxu0 %v335
    %1320 = vmatpush1.msra.mxu0 %v334
    %1321 = vmatprep.subr.mxu0 %v331
    %1322 = vmatpush1.msra.mxu0 %v330
    %1323 = vmatprep.subr.mxu0 %v327
    %1324 = vmatpush1.msra.mxu0 %v326
    %1325 = vmatprep.subr.mxu0 %v323
    %1326 = vmatpush1.msra.mxu0 %v322
    %1327 = vmatprep.subr.mxu0 %v319
    %1328 = vmatpush1.msra.mxu0 %v318
    %1329 = vmatprep.subr.mxu0 %v315
    %1330 = vmatpush1.msra.mxu0 %v314
    %1331 = vmatprep.subr.mxu0 %v311
    %1332 = vmatpush1.msra.mxu0 %v310
    %1333 = vmatprep.subr.mxu0 0.0
    %1334 = vmatpush2.msra.mxu0 0.0
    %1335 = vmatprep.subr.mxu0 0.0
    %1336 = vmatpush2.msra.mxu0 0.0
    %1337 = vmatprep.subr.mxu0 0.0
    %1338 = vmatpush2.msra.mxu0 0.0
    %1339 = vmatprep.subr.mxu0 0.0
    %1340 = vmatpush2.msra.mxu0 0.0
    %1341 = vmatprep.subr.mxu0 0.0
    %1342 = vmatpush2.msra.mxu0 0.0
    %1343 = vmatprep.subr.mxu0 0.0
    %1344 = vmatpush2.msra.mxu0 0.0
    %1345 = vmatprep.subr.mxu0 0.0
    %1346 = vmatpush2.msra.mxu0 0.0
    %1347 = vmatprep.subr.mxu0 0.0
    %1348 = vmatpush2.msra.mxu0 0.0
    %1349 = vmatprep.subr.mxu0 0.0
    %1350 = vmatpush2.msra.mxu0 0.0
    %1351 = vmatprep.subr.mxu0 0.0
    %1352 = vmatpush2.msra.mxu0 0.0
    %1353 = vmatprep.subr.mxu0 0.0
    %1354 = vmatpush2.msra.mxu0 0.0
    %1355 = vmatprep.subr.mxu0 0.0
    %1356 = vmatpush2.msra.mxu0 0.0
    %1357 = vmatprep.subr.mxu0 0.0
    %1358 = vmatpush2.msra.mxu0 0.0
    %1359 = vmatprep.subr.mxu0 0.0
    %1360 = vmatpush2.msra.mxu0 0.0
    %1361 = vmatprep.subr.mxu0 0.0
    %1362 = vmatpush2.msra.mxu0 0.0
    %1363 = vmatprep.subr.mxu0 0.0
    %1364 = vmatpush2.msra.mxu0 0.0
    %1365 = vmatprep.mubr.f32.mxu0 0.0
    %1366 = vmatmul.mubr.f32.gmra.mxu0 %v1296
    %v1367 = vpop.f32.mrf.mxu0
    %v1368 = vadd.f32 0.0, %v1367
    %v1369 = vpop.f32.mrf.mxu0
    %v1370 = vadd.f32 0.0, %v1369
    %1371 = vdwg.mxu0
    %1372 = vmatprep.subr.mxu0 %v373
    %1373 = vmatpush1.msra.mxu0 %v372
    %1374 = vmatprep.subr.mxu0 %v369
    %1375 = vmatpush1.msra.mxu0 %v368
    %1376 = vmatprep.subr.mxu0 %v365
    %1377 = vmatpush1.msra.mxu0 %v364
    %1378 = vmatprep.subr.mxu0 %v361
    %1379 = vmatpush1.msra.mxu0 %v360
    %1380 = vmatprep.subr.mxu0 %v357
    %1381 = vmatpush1.msra.mxu0 %v356
    %1382 = vmatprep.subr.mxu0 %v353
    %1383 = vmatpush1.msra.mxu0 %v352
    %1384 = vmatprep.subr.mxu0 %v349
    %1385 = vmatpush1.msra.mxu0 %v348
    %1386 = vmatprep.subr.mxu0 %v345
    %1387 = vmatpush1.msra.mxu0 %v344
    %1388 = vmatprep.subr.mxu0 %v341
    %1389 = vmatpush1.msra.mxu0 %v340
    %1390 = vmatprep.subr.mxu0 %v337
    %1391 = vmatpush1.msra.mxu0 %v336
    %1392 = vmatprep.subr.mxu0 %v333
    %1393 = vmatpush1.msra.mxu0 %v332
    %1394 = vmatprep.subr.mxu0 %v329
    %1395 = vmatpush1.msra.mxu0 %v328
    %1396 = vmatprep.subr.mxu0 %v325
    %1397 = vmatpush1.msra.mxu0 %v324
    %1398 = vmatprep.subr.mxu0 %v321
    %1399 = vmatpush1.msra.mxu0 %v320
    %1400 = vmatprep.subr.mxu0 %v317
    %1401 = vmatpush1.msra.mxu0 %v316
    %1402 = vmatprep.subr.mxu0 %v313
    %1403 = vmatpush1.msra.mxu0 %v312
    %1404 = vmatprep.subr.mxu0 0.0
    %1405 = vmatpush2.msra.mxu0 0.0
    %1406 = vmatprep.subr.mxu0 0.0
    %1407 = vmatpush2.msra.mxu0 0.0
    %1408 = vmatprep.subr.mxu0 0.0
    %1409 = vmatpush2.msra.mxu0 0.0
    %1410 = vmatprep.subr.mxu0 0.0
    %1411 = vmatpush2.msra.mxu0 0.0
    %1412 = vmatprep.subr.mxu0 0.0
    %1413 = vmatpush2.msra.mxu0 0.0
    %1414 = vmatprep.subr.mxu0 0.0
    %1415 = vmatpush2.msra.mxu0 0.0
    %1416 = vmatprep.subr.mxu0 0.0
    %1417 = vmatpush2.msra.mxu0 0.0
    %1418 = vmatprep.subr.mxu0 0.0
    %1419 = vmatpush2.msra.mxu0 0.0
    %1420 = vmatprep.subr.mxu0 0.0
    %1421 = vmatpush2.msra.mxu0 0.0
    %1422 = vmatprep.subr.mxu0 0.0
    %1423 = vmatpush2.msra.mxu0 0.0
    %1424 = vmatprep.subr.mxu0 0.0
    %1425 = vmatpush2.msra.mxu0 0.0
    %1426 = vmatprep.subr.mxu0 0.0
    %1427 = vmatpush2.msra.mxu0 0.0
    %1428 = vmatprep.subr.mxu0 0.0
    %1429 = vmatpush2.msra.mxu0 0.0
    %1430 = vmatprep.subr.mxu0 0.0
    %1431 = vmatpush2.msra.mxu0 0.0
    %1432 = vmatprep.subr.mxu0 0.0
    %1433 = vmatpush2.msra.mxu0 0.0
    %1434 = vmatprep.subr.mxu0 0.0
    %1435 = vmatpush2.msra.mxu0 0.0
    %1436 = vmatprep.mubr.f32.mxu0 0.0
    %1437 = vmatmul.mubr.f32.gmra.mxu0 %v1296
    %v1438 = vpop.f32.mrf.mxu0
    %v1439 = vadd.f32 0.0, %v1438
    %v1440 = vpop.f32.mrf.mxu0
    %v1441 = vadd.f32 0.0, %v1440
    %1442 = vdwg.mxu0
    %v1447 = vrot.slane %v1368, 6
    %v1448 = vrot.slane %v1370, 6
    %v1449 = vrot.slane %v1439, 6
    %v1450 = vrot.slane %v1441, 6
    %v1455 = vadd.f32 %v1297, %v1447
    %v1456 = vadd.f32 %v1298, %v1448
    %v1457 = vadd.f32 %v1299, %v1449
    %v1458 = vadd.f32 %v1300, %v1450
    %v1459 = vxor.u32 %v1455, 2147483648
    %v1460 = vmul.f32 %v1459, 1.442695
    %v1461 = vpow.pop %v1460
    %v1462 = vadd.f32 %v1461, 1.0
    %v1463 = vrcp.pop %v1462
    %v1464 = vmul.f32 1.0, %v1463
    %v1465 = vxor.u32 %v1456, 2147483648
    %v1466 = vmul.f32 %v1465, 1.442695
    %v1467 = vpow.pop %v1466
    %v1468 = vadd.f32 %v1467, 1.0
    %v1469 = vrcp.pop %v1468
    %v1470 = vmul.f32 1.0, %v1469
    %v1471 = vtanh.pop %v1457
    %v1472 = vxor.u32 %v1458, 2147483648
    %v1473 = vmul.f32 %v1472, 1.442695
    %v1474 = vpow.pop %v1473
    %v1475 = vadd.f32 %v1474, 1.0
    %v1476 = vrcp.pop %v1475
    %v1477 = vmul.f32 1.0, %v1476
    %v1479 = vrot.slane %v1294, 6
    %v1481 = vmul.f32 %v1470, %v1479
    %v1482 = vmul.f32 %v1464, %v1471
    %v1483 = vadd.f32 %v1481, %v1482
    %v1484 = vtanh.pop %v1483
    %v1485 = vmul.f32 %v1477, %v1484
    %v1486 = vld [vmem:[#allocation2 + $0x20] sm:$0x30]
    %v1487 = vld [vmem:[#allocation2 + $0x28] sm:$0x30]
    %v1488 = vld [vmem:[#allocation2 + $0x30] sm:$0x30]
    %v1489 = vld [vmem:[#allocation2 + $0x38] sm:$0x30]
    %v1491 = vrot.slane %v1485, 2
    %1493 = vmatprep.subr.mxu0 %v371
    %1494 = vmatpush1.msra.mxu0 %v370
    %1495 = vmatprep.subr.mxu0 %v367
    %1496 = vmatpush1.msra.mxu0 %v366
    %1497 = vmatprep.subr.mxu0 %v363
    %1498 = vmatpush1.msra.mxu0 %v362
    %1499 = vmatprep.subr.mxu0 %v359
    %1500 = vmatpush1.msra.mxu0 %v358
    %1501 = vmatprep.subr.mxu0 %v355
    %1502 = vmatpush1.msra.mxu0 %v354
    %1503 = vmatprep.subr.mxu0 %v351
    %1504 = vmatpush1.msra.mxu0 %v350
    %1505 = vmatprep.subr.mxu0 %v347
    %1506 = vmatpush1.msra.mxu0 %v346
    %1507 = vmatprep.subr.mxu0 %v343
    %1508 = vmatpush1.msra.mxu0 %v342
    %1509 = vmatprep.subr.mxu0 %v339
    %1510 = vmatpush1.msra.mxu0 %v338
    %1511 = vmatprep.subr.mxu0 %v335
    %1512 = vmatpush1.msra.mxu0 %v334
    %1513 = vmatprep.subr.mxu0 %v331
    %1514 = vmatpush1.msra.mxu0 %v330
    %1515 = vmatprep.subr.mxu0 %v327
    %1516 = vmatpush1.msra.mxu0 %v326
    %1517 = vmatprep.subr.mxu0 %v323
    %1518 = vmatpush1.msra.mxu0 %v322
    %1519 = vmatprep.subr.mxu0 %v319
    %1520 = vmatpush1.msra.mxu0 %v318
    %1521 = vmatprep.subr.mxu0 %v315
    %1522 = vmatpush1.msra.mxu0 %v314
    %1523 = vmatprep.subr.mxu0 %v311
    %1524 = vmatpush1.msra.mxu0 %v310
    %1525 = vmatprep.subr.mxu0 0.0
    %1526 = vmatpush2.msra.mxu0 0.0
    %1527 = vmatprep.subr.mxu0 0.0
    %1528 = vmatpush2.msra.mxu0 0.0
    %1529 = vmatprep.subr.mxu0 0.0
    %1530 = vmatpush2.msra.mxu0 0.0
    %1531 = vmatprep.subr.mxu0 0.0
    %1532 = vmatpush2.msra.mxu0 0.0
    %1533 = vmatprep.subr.mxu0 0.0
    %1534 = vmatpush2.msra.mxu0 0.0
    %1535 = vmatprep.subr.mxu0 0.0
    %1536 = vmatpush2.msra.mxu0 0.0
    %1537 = vmatprep.subr.mxu0 0.0
    %1538 = vmatpush2.msra.mxu0 0.0
    %1539 = vmatprep.subr.mxu0 0.0
    %1540 = vmatpush2.msra.mxu0 0.0
    %1541 = vmatprep.subr.mxu0 0.0
    %1542 = vmatpush2.msra.mxu0 0.0
    %1543 = vmatprep.subr.mxu0 0.0
    %1544 = vmatpush2.msra.mxu0 0.0
    %1545 = vmatprep.subr.mxu0 0.0
    %1546 = vmatpush2.msra.mxu0 0.0
    %1547 = vmatprep.subr.mxu0 0.0
    %1548 = vmatpush2.msra.mxu0 0.0
    %1549 = vmatprep.subr.mxu0 0.0
    %1550 = vmatpush2.msra.mxu0 0.0
    %1551 = vmatprep.subr.mxu0 0.0
    %1552 = vmatpush2.msra.mxu0 0.0
    %1553 = vmatprep.subr.mxu0 0.0
    %1554 = vmatpush2.msra.mxu0 0.0
    %1555 = vmatprep.subr.mxu0 0.0
    %1556 = vmatpush2.msra.mxu0 0.0
    %1557 = vmatprep.mubr.f32.mxu0 0.0
    %1558 = vmatmul.mubr.f32.gmra.mxu0 %v1491
    %v1559 = vpop.f32.mrf.mxu0
    %v1560 = vadd.f32 0.0, %v1559
    %v1561 = vpop.f32.mrf.mxu0
    %v1562 = vadd.f32 0.0, %v1561
    %1563 = vdwg.mxu0
    %1564 = vmatprep.subr.mxu0 %v373
    %1565 = vmatpush1.msra.mxu0 %v372
    %1566 = vmatprep.subr.mxu0 %v369
    %1567 = vmatpush1.msra.mxu0 %v368
    %1568 = vmatprep.subr.mxu0 %v365
    %1569 = vmatpush1.msra.mxu0 %v364
    %1570 = vmatprep.subr.mxu0 %v361
    %1571 = vmatpush1.msra.mxu0 %v360
    %1572 = vmatprep.subr.mxu0 %v357
    %1573 = vmatpush1.msra.mxu0 %v356
    %1574 = vmatprep.subr.mxu0 %v353
    %1575 = vmatpush1.msra.mxu0 %v352
    %1576 = vmatprep.subr.mxu0 %v349
    %1577 = vmatpush1.msra.mxu0 %v348
    %1578 = vmatprep.subr.mxu0 %v345
    %1579 = vmatpush1.msra.mxu0 %v344
    %1580 = vmatprep.subr.mxu0 %v341
    %1581 = vmatpush1.msra.mxu0 %v340
    %1582 = vmatprep.subr.mxu0 %v337
    %1583 = vmatpush1.msra.mxu0 %v336
    %1584 = vmatprep.subr.mxu0 %v333
    %1585 = vmatpush1.msra.mxu0 %v332
    %1586 = vmatprep.subr.mxu0 %v329
    %1587 = vmatpush1.msra.mxu0 %v328
    %1588 = vmatprep.subr.mxu0 %v325
    %1589 = vmatpush1.msra.mxu0 %v324
    %1590 = vmatprep.subr.mxu0 %v321
    %1591 = vmatpush1.msra.mxu0 %v320
    %1592 = vmatprep.subr.mxu0 %v317
    %1593 = vmatpush1.msra.mxu0 %v316
    %1594 = vmatprep.subr.mxu0 %v313
    %1595 = vmatpush1.msra.mxu0 %v312
    %1596 = vmatprep.subr.mxu0 0.0
    %1597 = vmatpush2.msra.mxu0 0.0
    %1598 = vmatprep.subr.mxu0 0.0
    %1599 = vmatpush2.msra.mxu0 0.0
    %1600 = vmatprep.subr.mxu0 0.0
    %1601 = vmatpush2.msra.mxu0 0.0
    %1602 = vmatprep.subr.mxu0 0.0
    %1603 = vmatpush2.msra.mxu0 0.0
    %1604 = vmatprep.subr.mxu0 0.0
    %1605 = vmatpush2.msra.mxu0 0.0
    %1606 = vmatprep.subr.mxu0 0.0
    %1607 = vmatpush2.msra.mxu0 0.0
    %1608 = vmatprep.subr.mxu0 0.0
    %1609 = vmatpush2.msra.mxu0 0.0
    %1610 = vmatprep.subr.mxu0 0.0
    %1611 = vmatpush2.msra.mxu0 0.0
    %1612 = vmatprep.subr.mxu0 0.0
    %1613 = vmatpush2.msra.mxu0 0.0
    %1614 = vmatprep.subr.mxu0 0.0
    %1615 = vmatpush2.msra.mxu0 0.0
    %1616 = vmatprep.subr.mxu0 0.0
    %1617 = vmatpush2.msra.mxu0 0.0
    %1618 = vmatprep.subr.mxu0 0.0
    %1619 = vmatpush2.msra.mxu0 0.0
    %1620 = vmatprep.subr.mxu0 0.0
    %1621 = vmatpush2.msra.mxu0 0.0
    %1622 = vmatprep.subr.mxu0 0.0
    %1623 = vmatpush2.msra.mxu0 0.0
    %1624 = vmatprep.subr.mxu0 0.0
    %1625 = vmatpush2.msra.mxu0 0.0
    %1626 = vmatprep.subr.mxu0 0.0
    %1627 = vmatpush2.msra.mxu0 0.0
    %1628 = vmatprep.mubr.f32.mxu0 0.0
    %1629 = vmatmul.mubr.f32.gmra.mxu0 %v1491
    %v1630 = vpop.f32.mrf.mxu0
    %v1631 = vadd.f32 0.0, %v1630
    %v1632 = vpop.f32.mrf.mxu0
    %v1633 = vadd.f32 0.0, %v1632
    %1634 = vdwg.mxu0
    %v1639 = vrot.slane %v1560, 4
    %v1640 = vrot.slane %v1562, 4
    %v1641 = vrot.slane %v1631, 4
    %v1642 = vrot.slane %v1633, 4
    %v1647 = vadd.f32 %v1486, %v1639
    %v1648 = vadd.f32 %v1487, %v1640
    %v1649 = vadd.f32 %v1488, %v1641
    %v1650 = vadd.f32 %v1489, %v1642
    %v1651 = vxor.u32 %v1647, 2147483648
    %v1652 = vmul.f32 %v1651, 1.442695
    %v1653 = vpow.pop %v1652
    %v1654 = vadd.f32 %v1653, 1.0
    %v1655 = vrcp.pop %v1654
    %v1656 = vmul.f32 1.0, %v1655
    %v1657 = vxor.u32 %v1648, 2147483648
    %v1658 = vmul.f32 %v1657, 1.442695
    %v1659 = vpow.pop %v1658
    %v1660 = vadd.f32 %v1659, 1.0
    %v1661 = vrcp.pop %v1660
    %v1662 = vmul.f32 1.0, %v1661
    %v1663 = vtanh.pop %v1649
    %v1664 = vxor.u32 %v1650, 2147483648
    %v1665 = vmul.f32 %v1664, 1.442695
    %v1666 = vpow.pop %v1665
    %v1667 = vadd.f32 %v1666, 1.0
    %v1668 = vrcp.pop %v1667
    %v1669 = vmul.f32 1.0, %v1668
    %v1671 = vrot.slane %v1483, 6
    %v1673 = vmul.f32 %v1662, %v1671
    %v1674 = vmul.f32 %v1656, %v1663
    %v1675 = vadd.f32 %v1673, %v1674
    %v1676 = vtanh.pop %v1675
    %v1677 = vmul.f32 %v1669, %v1676
    %v1678 = vld [vmem:[#allocation2 + $0x20] sm:$0xc0]
    %v1679 = vld [vmem:[#allocation2 + $0x28] sm:$0xc0]
    %v1680 = vld [vmem:[#allocation2 + $0x30] sm:$0xc0]
    %v1681 = vld [vmem:[#allocation2 + $0x38] sm:$0xc0]
    %v1683 = vrot.slane %v1677, 4
    %1685 = vmatprep.subr.mxu0 %v371
    %1686 = vmatpush1.msra.mxu0 %v370
    %1687 = vmatprep.subr.mxu0 %v367
    %1688 = vmatpush1.msra.mxu0 %v366
    %1689 = vmatprep.subr.mxu0 %v363
    %1690 = vmatpush1.msra.mxu0 %v362
    %1691 = vmatprep.subr.mxu0 %v359
    %1692 = vmatpush1.msra.mxu0 %v358
    %1693 = vmatprep.subr.mxu0 %v355
    %1694 = vmatpush1.msra.mxu0 %v354
    %1695 = vmatprep.subr.mxu0 %v351
    %1696 = vmatpush1.msra.mxu0 %v350
    %1697 = vmatprep.subr.mxu0 %v347
    %1698 = vmatpush1.msra.mxu0 %v346
    %1699 = vmatprep.subr.mxu0 %v343
    %1700 = vmatpush1.msra.mxu0 %v342
    %1701 = vmatprep.subr.mxu0 %v339
    %1702 = vmatpush1.msra.mxu0 %v338
    %1703 = vmatprep.subr.mxu0 %v335
    %1704 = vmatpush1.msra.mxu0 %v334
    %1705 = vmatprep.subr.mxu0 %v331
    %1706 = vmatpush1.msra.mxu0 %v330
    %1707 = vmatprep.subr.mxu0 %v327
    %1708 = vmatpush1.msra.mxu0 %v326
    %1709 = vmatprep.subr.mxu0 %v323
    %1710 = vmatpush1.msra.mxu0 %v322
    %1711 = vmatprep.subr.mxu0 %v319
    %1712 = vmatpush1.msra.mxu0 %v318
    %1713 = vmatprep.subr.mxu0 %v315
    %1714 = vmatpush1.msra.mxu0 %v314
    %1715 = vmatprep.subr.mxu0 %v311
    %1716 = vmatpush1.msra.mxu0 %v310
    %1717 = vmatprep.subr.mxu0 0.0
    %1718 = vmatpush2.msra.mxu0 0.0
    %1719 = vmatprep.subr.mxu0 0.0
    %1720 = vmatpush2.msra.mxu0 0.0
    %1721 = vmatprep.subr.mxu0 0.0
    %1722 = vmatpush2.msra.mxu0 0.0
    %1723 = vmatprep.subr.mxu0 0.0
    %1724 = vmatpush2.msra.mxu0 0.0
    %1725 = vmatprep.subr.mxu0 0.0
    %1726 = vmatpush2.msra.mxu0 0.0
    %1727 = vmatprep.subr.mxu0 0.0
    %1728 = vmatpush2.msra.mxu0 0.0
    %1729 = vmatprep.subr.mxu0 0.0
    %1730 = vmatpush2.msra.mxu0 0.0
    %1731 = vmatprep.subr.mxu0 0.0
    %1732 = vmatpush2.msra.mxu0 0.0
    %1733 = vmatprep.subr.mxu0 0.0
    %1734 = vmatpush2.msra.mxu0 0.0
    %1735 = vmatprep.subr.mxu0 0.0
    %1736 = vmatpush2.msra.mxu0 0.0
    %1737 = vmatprep.subr.mxu0 0.0
    %1738 = vmatpush2.msra.mxu0 0.0
    %1739 = vmatprep.subr.mxu0 0.0
    %1740 = vmatpush2.msra.mxu0 0.0
    %1741 = vmatprep.subr.mxu0 0.0
    %1742 = vmatpush2.msra.mxu0 0.0
    %1743 = vmatprep.subr.mxu0 0.0
    %1744 = vmatpush2.msra.mxu0 0.0
    %1745 = vmatprep.subr.mxu0 0.0
    %1746 = vmatpush2.msra.mxu0 0.0
    %1747 = vmatprep.subr.mxu0 0.0
    %1748 = vmatpush2.msra.mxu0 0.0
    %1749 = vmatprep.mubr.f32.mxu0 0.0
    %1750 = vmatmul.mubr.f32.gmra.mxu0 %v1683
    %v1751 = vpop.f32.mrf.mxu0
    %v1752 = vadd.f32 0.0, %v1751
    %v1753 = vpop.f32.mrf.mxu0
    %v1754 = vadd.f32 0.0, %v1753
    %1755 = vdwg.mxu0
    %1756 = vmatprep.subr.mxu0 %v373
    %1757 = vmatpush1.msra.mxu0 %v372
    %1758 = vmatprep.subr.mxu0 %v369
    %1759 = vmatpush1.msra.mxu0 %v368
    %1760 = vmatprep.subr.mxu0 %v365
    %1761 = vmatpush1.msra.mxu0 %v364
    %1762 = vmatprep.subr.mxu0 %v361
    %1763 = vmatpush1.msra.mxu0 %v360
    %1764 = vmatprep.subr.mxu0 %v357
    %1765 = vmatpush1.msra.mxu0 %v356
    %1766 = vmatprep.subr.mxu0 %v353
    %1767 = vmatpush1.msra.mxu0 %v352
    %1768 = vmatprep.subr.mxu0 %v349
    %1769 = vmatpush1.msra.mxu0 %v348
    %1770 = vmatprep.subr.mxu0 %v345
    %1771 = vmatpush1.msra.mxu0 %v344
    %1772 = vmatprep.subr.mxu0 %v341
    %1773 = vmatpush1.msra.mxu0 %v340
    %1774 = vmatprep.subr.mxu0 %v337
    %1775 = vmatpush1.msra.mxu0 %v336
    %1776 = vmatprep.subr.mxu0 %v333
    %1777 = vmatpush1.msra.mxu0 %v332
    %1778 = vmatprep.subr.mxu0 %v329
    %1779 = vmatpush1.msra.mxu0 %v328
    %1780 = vmatprep.subr.mxu0 %v325
    %1781 = vmatpush1.msra.mxu0 %v324
    %1782 = vmatprep.subr.mxu0 %v321
    %1783 = vmatpush1.msra.mxu0 %v320
    %1784 = vmatprep.subr.mxu0 %v317
    %1785 = vmatpush1.msra.mxu0 %v316
    %1786 = vmatprep.subr.mxu0 %v313
    %1787 = vmatpush1.msra.mxu0 %v312
    %1788 = vmatprep.subr.mxu0 0.0
    %1789 = vmatpush2.msra.mxu0 0.0
    %1790 = vmatprep.subr.mxu0 0.0
    %1791 = vmatpush2.msra.mxu0 0.0
    %1792 = vmatprep.subr.mxu0 0.0
    %1793 = vmatpush2.msra.mxu0 0.0
    %1794 = vmatprep.subr.mxu0 0.0
    %1795 = vmatpush2.msra.mxu0 0.0
    %1796 = vmatprep.subr.mxu0 0.0
    %1797 = vmatpush2.msra.mxu0 0.0
    %1798 = vmatprep.subr.mxu0 0.0
    %1799 = vmatpush2.msra.mxu0 0.0
    %1800 = vmatprep.subr.mxu0 0.0
    %1801 = vmatpush2.msra.mxu0 0.0
    %1802 = vmatprep.subr.mxu0 0.0
    %1803 = vmatpush2.msra.mxu0 0.0
    %1804 = vmatprep.subr.mxu0 0.0
    %1805 = vmatpush2.msra.mxu0 0.0
    %1806 = vmatprep.subr.mxu0 0.0
    %1807 = vmatpush2.msra.mxu0 0.0
    %1808 = vmatprep.subr.mxu0 0.0
    %1809 = vmatpush2.msra.mxu0 0.0
    %1810 = vmatprep.subr.mxu0 0.0
    %1811 = vmatpush2.msra.mxu0 0.0
    %1812 = vmatprep.subr.mxu0 0.0
    %1813 = vmatpush2.msra.mxu0 0.0
    %1814 = vmatprep.subr.mxu0 0.0
    %1815 = vmatpush2.msra.mxu0 0.0
    %1816 = vmatprep.subr.mxu0 0.0
    %1817 = vmatpush2.msra.mxu0 0.0
    %1818 = vmatprep.subr.mxu0 0.0
    %1819 = vmatpush2.msra.mxu0 0.0
    %1820 = vmatprep.mubr.f32.mxu0 0.0
    %1821 = vmatmul.mubr.f32.gmra.mxu0 %v1683
    %v1822 = vpop.f32.mrf.mxu0
    %v1823 = vadd.f32 0.0, %v1822
    %v1824 = vpop.f32.mrf.mxu0
    %v1825 = vadd.f32 0.0, %v1824
    %1826 = vdwg.mxu0
    %v1831 = vrot.slane %v1752, 2
    %v1832 = vrot.slane %v1754, 2
    %v1833 = vrot.slane %v1823, 2
    %v1834 = vrot.slane %v1825, 2
    %v1839 = vadd.f32 %v1678, %v1831
    %v1840 = vadd.f32 %v1679, %v1832
    %v1841 = vadd.f32 %v1680, %v1833
    %v1842 = vadd.f32 %v1681, %v1834
    %v1843 = vxor.u32 %v1839, 2147483648
    %v1844 = vmul.f32 %v1843, 1.442695
    %v1845 = vpow.pop %v1844
    %v1846 = vadd.f32 %v1845, 1.0
    %v1847 = vrcp.pop %v1846
    %v1848 = vmul.f32 1.0, %v1847
    %v1849 = vxor.u32 %v1840, 2147483648
    %v1850 = vmul.f32 %v1849, 1.442695
    %v1851 = vpow.pop %v1850
    %v1852 = vadd.f32 %v1851, 1.0
    %v1853 = vrcp.pop %v1852
    %v1854 = vmul.f32 1.0, %v1853
    %v1855 = vtanh.pop %v1841
    %v1856 = vxor.u32 %v1842, 2147483648
    %v1857 = vmul.f32 %v1856, 1.442695
    %v1858 = vpow.pop %v1857
    %v1859 = vadd.f32 %v1858, 1.0
    %v1860 = vrcp.pop %v1859
    %v1861 = vmul.f32 1.0, %v1860
    %v1863 = vrot.slane %v1675, 6
    %v1865 = vmul.f32 %v1854, %v1863
    %v1866 = vmul.f32 %v1848, %v1855
    %v1867 = vadd.f32 %v1865, %v1866
    %v1868 = vtanh.pop %v1867
    %v1869 = vmul.f32 %v1861, %v1868
    %v1870 = vld [vmem:[%s6] sm:$0xff]
    %v1871 = vld [vmem:[%s6 + $0x8] sm:$0xff]
    %v1872 = vld [vmem:[%s6 + $0x10] sm:$0xff]
    %v1873 = vld [vmem:[%s6 + $0x18] sm:$0xff]
    %v1874 = vld [vmem:[%s6 + $0x20] sm:$0xff]
    %v1875 = vld [vmem:[%s6 + $0x28] sm:$0xff]
    %v1876 = vld [vmem:[%s6 + $0x30] sm:$0xff]
    %v1877 = vld [vmem:[%s6 + $0x38] sm:$0xff]
    %v1878 = vld [vmem:[%s6 + $0x40] sm:$0xff]
    %v1879 = vld [vmem:[%s6 + $0x48] sm:$0xff]
    %v1880 = vld [vmem:[%s6 + $0x50] sm:$0xff]
    %v1881 = vld [vmem:[%s6 + $0x58] sm:$0xff]
    %v1882 = vld [vmem:[%s6 + $0x60] sm:$0xff]
    %v1883 = vld [vmem:[%s6 + $0x68] sm:$0xff]
    %v1884 = vld [vmem:[%s6 + $0x70] sm:$0xff]
    %v1885 = vld [vmem:[%s6 + $0x78] sm:$0xff]
    %v1886 = vld [vmem:[%s7] sm:$0x1]
    %v1888 = vlaneseq
    %v1889 = vshrl.u32 %v1888, 7
    %v1890 = vsub.s32 0, %v1889
    %v1891 = vrot.slane %v1886, %v1890
    %v1894 = vrot.slane %v1869, 6
    %1896 = vmatprep.subr.mxu0 0.0
    %1897 = vmatpush1.msra.mxu0 %v1885
    %1898 = vmatprep.subr.mxu0 0.0
    %1899 = vmatpush1.msra.mxu0 %v1884
    %1900 = vmatprep.subr.mxu0 0.0
    %1901 = vmatpush1.msra.mxu0 %v1883
    %1902 = vmatprep.subr.mxu0 0.0
    %1903 = vmatpush1.msra.mxu0 %v1882
    %1904 = vmatprep.subr.mxu0 0.0
    %1905 = vmatpush1.msra.mxu0 %v1881
    %1906 = vmatprep.subr.mxu0 0.0
    %1907 = vmatpush1.msra.mxu0 %v1880
    %1908 = vmatprep.subr.mxu0 0.0
    %1909 = vmatpush1.msra.mxu0 %v1879
    %1910 = vmatprep.subr.mxu0 0.0
    %1911 = vmatpush1.msra.mxu0 %v1878
    %1912 = vmatprep.subr.mxu0 0.0
    %1913 = vmatpush1.msra.mxu0 %v1877
    %1914 = vmatprep.subr.mxu0 0.0
    %1915 = vmatpush1.msra.mxu0 %v1876
    %1916 = vmatprep.subr.mxu0 0.0
    %1917 = vmatpush1.msra.mxu0 %v1875
    %1918 = vmatprep.subr.mxu0 0.0
    %1919 = vmatpush1.msra.mxu0 %v1874
    %1920 = vmatprep.subr.mxu0 0.0
    %1921 = vmatpush1.msra.mxu0 %v1873
    %1922 = vmatprep.subr.mxu0 0.0
    %1923 = vmatpush1.msra.mxu0 %v1872
    %1924 = vmatprep.subr.mxu0 0.0
    %1925 = vmatpush1.msra.mxu0 %v1871
    %1926 = vmatprep.subr.mxu0 0.0
    %1927 = vmatpush1.msra.mxu0 %v1870
    %1928 = vmatprep.subr.mxu0 0.0
    %1929 = vmatpush2.msra.mxu0 0.0
    %1930 = vmatprep.subr.mxu0 0.0
    %1931 = vmatpush2.msra.mxu0 0.0
    %1932 = vmatprep.subr.mxu0 0.0
    %1933 = vmatpush2.msra.mxu0 0.0
    %1934 = vmatprep.subr.mxu0 0.0
    %1935 = vmatpush2.msra.mxu0 0.0
    %1936 = vmatprep.subr.mxu0 0.0
    %1937 = vmatpush2.msra.mxu0 0.0
    %1938 = vmatprep.subr.mxu0 0.0
    %1939 = vmatpush2.msra.mxu0 0.0
    %1940 = vmatprep.subr.mxu0 0.0
    %1941 = vmatpush2.msra.mxu0 0.0
    %1942 = vmatprep.subr.mxu0 0.0
    %1943 = vmatpush2.msra.mxu0 0.0
    %1944 = vmatprep.subr.mxu0 0.0
    %1945 = vmatpush2.msra.mxu0 0.0
    %1946 = vmatprep.subr.mxu0 0.0
    %1947 = vmatpush2.msra.mxu0 0.0
    %1948 = vmatprep.subr.mxu0 0.0
    %1949 = vmatpush2.msra.mxu0 0.0
    %1950 = vmatprep.subr.mxu0 0.0
    %1951 = vmatpush2.msra.mxu0 0.0
    %1952 = vmatprep.subr.mxu0 0.0
    %1953 = vmatpush2.msra.mxu0 0.0
    %1954 = vmatprep.subr.mxu0 0.0
    %1955 = vmatpush2.msra.mxu0 0.0
    %1956 = vmatprep.subr.mxu0 0.0
    %1957 = vmatpush2.msra.mxu0 0.0
    %1958 = vmatprep.subr.mxu0 0.0
    %1959 = vmatpush2.msra.mxu0 0.0
    %1960 = vmatprep.mubr.f32.mxu0 0.0
    %1961 = vmatmul.mubr.f32.gmra.mxu0 %v1894
    %v1962 = vpop.f32.mrf.mxu0
    %v1963 = vadd.f32 %v1891, %v1962
    %v1964 = vpop.f32.mrf.mxu0
    %1965 = vdwg.mxu0
    %v1966 = vmax.f32 %v1963, 0.0
    %v1967 = vld [vmem:[%s8] sm:$0xff]
    %v1968 = vld [vmem:[%s8 + $0x8] sm:$0xff]
    %v1969 = vld [vmem:[%s8 + $0x10] sm:$0xff]
    %v1970 = vld [vmem:[%s8 + $0x18] sm:$0xff]
    %v1971 = vld [vmem:[%s8 + $0x20] sm:$0xff]
    %v1972 = vld [vmem:[%s8 + $0x28] sm:$0xff]
    %v1973 = vld [vmem:[%s8 + $0x30] sm:$0xff]
    %v1974 = vld [vmem:[%s8 + $0x38] sm:$0xff]
    %v1975 = vld [vmem:[%s8 + $0x40] sm:$0xff]
    %v1976 = vld [vmem:[%s8 + $0x48] sm:$0xff]
    %v1977 = vld [vmem:[%s8 + $0x50] sm:$0xff]
    %v1978 = vld [vmem:[%s8 + $0x58] sm:$0xff]
    %v1979 = vld [vmem:[%s8 + $0x60] sm:$0xff]
    %v1980 = vld [vmem:[%s8 + $0x68] sm:$0xff]
    %v1981 = vld [vmem:[%s8 + $0x70] sm:$0xff]
    %v1982 = vld [vmem:[%s8 + $0x78] sm:$0xff]
    %v1983 = vld [vmem:[%s9] sm:$0x1]
    %v1985 = vlaneseq
    %v1986 = vshrl.u32 %v1985, 7
    %v1987 = vsub.s32 0, %v1986
    %v1988 = vrot.slane %v1983, %v1987
    %1990 = vmatprep.subr.mxu0 0.0
    %1991 = vmatpush1.msra.mxu0 %v1982
    %1992 = vmatprep.subr.mxu0 0.0
    %1993 = vmatpush1.msra.mxu0 %v1981
    %1994 = vmatprep.subr.mxu0 0.0
    %1995 = vmatpush1.msra.mxu0 %v1980
    %1996 = vmatprep.subr.mxu0 0.0
    %1997 = vmatpush1.msra.mxu0 %v1979
    %1998 = vmatprep.subr.mxu0 0.0
    %1999 = vmatpush1.msra.mxu0 %v1978
    %2000 = vmatprep.subr.mxu0 0.0
    %2001 = vmatpush1.msra.mxu0 %v1977
    %2002 = vmatprep.subr.mxu0 0.0
    %2003 = vmatpush1.msra.mxu0 %v1976
    %2004 = vmatprep.subr.mxu0 0.0
    %2005 = vmatpush1.msra.mxu0 %v1975
    %2006 = vmatprep.subr.mxu0 0.0
    %2007 = vmatpush1.msra.mxu0 %v1974
    %2008 = vmatprep.subr.mxu0 0.0
    %2009 = vmatpush1.msra.mxu0 %v1973
    %2010 = vmatprep.subr.mxu0 0.0
    %2011 = vmatpush1.msra.mxu0 %v1972
    %2012 = vmatprep.subr.mxu0 0.0
    %2013 = vmatpush1.msra.mxu0 %v1971
    %2014 = vmatprep.subr.mxu0 0.0
    %2015 = vmatpush1.msra.mxu0 %v1970
    %2016 = vmatprep.subr.mxu0 0.0
    %2017 = vmatpush1.msra.mxu0 %v1969
    %2018 = vmatprep.subr.mxu0 0.0
    %2019 = vmatpush1.msra.mxu0 %v1968
    %2020 = vmatprep.subr.mxu0 0.0
    %2021 = vmatpush1.msra.mxu0 %v1967
    %2022 = vmatprep.subr.mxu0 0.0
    %2023 = vmatpush2.msra.mxu0 0.0
    %2024 = vmatprep.subr.mxu0 0.0
    %2025 = vmatpush2.msra.mxu0 0.0
    %2026 = vmatprep.subr.mxu0 0.0
    %2027 = vmatpush2.msra.mxu0 0.0
    %2028 = vmatprep.subr.mxu0 0.0
    %2029 = vmatpush2.msra.mxu0 0.0
    %2030 = vmatprep.subr.mxu0 0.0
    %2031 = vmatpush2.msra.mxu0 0.0
    %2032 = vmatprep.subr.mxu0 0.0
    %2033 = vmatpush2.msra.mxu0 0.0
    %2034 = vmatprep.subr.mxu0 0.0
    %2035 = vmatpush2.msra.mxu0 0.0
    %2036 = vmatprep.subr.mxu0 0.0
    %2037 = vmatpush2.msra.mxu0 0.0
    %2038 = vmatprep.subr.mxu0 0.0
    %2039 = vmatpush2.msra.mxu0 0.0
    %2040 = vmatprep.subr.mxu0 0.0
    %2041 = vmatpush2.msra.mxu0 0.0
    %2042 = vmatprep.subr.mxu0 0.0
    %2043 = vmatpush2.msra.mxu0 0.0
    %2044 = vmatprep.subr.mxu0 0.0
    %2045 = vmatpush2.msra.mxu0 0.0
    %2046 = vmatprep.subr.mxu0 0.0
    %2047 = vmatpush2.msra.mxu0 0.0
    %2048 = vmatprep.subr.mxu0 0.0
    %2049 = vmatpush2.msra.mxu0 0.0
    %2050 = vmatprep.subr.mxu0 0.0
    %2051 = vmatpush2.msra.mxu0 0.0
    %2052 = vmatprep.subr.mxu0 0.0
    %2053 = vmatpush2.msra.mxu0 0.0
    %2054 = vmatprep.mubr.f32.mxu0 0.0
    %2055 = vmatmul.mubr.f32.gmra.mxu0 %v1966
    %v2056 = vpop.f32.mrf.mxu0
    %v2057 = vadd.f32 %v1988, %v2056
    %v2058 = vpop.f32.mrf.mxu0
    %2059 = vdwg.mxu0
    %v2060 = vmax.f32 %v2057, 0.0
    %v2061 = vld [vmem:[%s10] sm:$0xff]
    %v2062 = vld [vmem:[%s10 + $0x8] sm:$0xff]
    %v2063 = vld [vmem:[%s10 + $0x10] sm:$0xff]
    %v2064 = vld [vmem:[%s10 + $0x18] sm:$0xff]
    %v2065 = vld [vmem:[%s10 + $0x20] sm:$0xff]
    %v2066 = vld [vmem:[%s10 + $0x28] sm:$0xff]
    %v2067 = vld [vmem:[%s10 + $0x30] sm:$0xff]
    %v2068 = vld [vmem:[%s10 + $0x38] sm:$0xff]
    %v2069 = vld [vmem:[%s11] sm:$0x1]
    %v2071 = vlaneseq
    %v2072 = vshrl.u32 %v2071, 7
    %v2073 = vsub.s32 0, %v2072
    %v2074 = vrot.slane %v2069, %v2073
    %vm2076 = vcmask 523264
    %v2078 = vsel %vm2076, %v2060, 0
    %2080 = vmatprep.subr.mxu0 0.0
    %2081 = vmatpush1.msra.mxu0 0.0
    %2082 = vmatprep.subr.mxu0 0.0
    %2083 = vmatpush1.msra.mxu0 0.0
    %2084 = vmatprep.subr.mxu0 0.0
    %2085 = vmatpush1.msra.mxu0 0.0
    %2086 = vmatprep.subr.mxu0 0.0
    %2087 = vmatpush1.msra.mxu0 0.0
    %2088 = vmatprep.subr.mxu0 0.0
    %2089 = vmatpush1.msra.mxu0 0.0
    %2090 = vmatprep.subr.mxu0 0.0
    %2091 = vmatpush1.msra.mxu0 0.0
    %2092 = vmatprep.subr.mxu0 0.0
    %2093 = vmatpush1.msra.mxu0 0.0
    %2094 = vmatprep.subr.mxu0 0.0
    %2095 = vmatpush1.msra.mxu0 0.0
    %2096 = vmatprep.subr.mxu0 0.0
    %2097 = vmatpush1.msra.mxu0 %v2068
    %2098 = vmatprep.subr.mxu0 0.0
    %2099 = vmatpush1.msra.mxu0 %v2067
    %2100 = vmatprep.subr.mxu0 0.0
    %2101 = vmatpush1.msra.mxu0 %v2066
    %2102 = vmatprep.subr.mxu0 0.0
    %2103 = vmatpush1.msra.mxu0 %v2065
    %2104 = vmatprep.subr.mxu0 0.0
    %2105 = vmatpush1.msra.mxu0 %v2064
    %2106 = vmatprep.subr.mxu0 0.0
    %2107 = vmatpush1.msra.mxu0 %v2063
    %2108 = vmatprep.subr.mxu0 0.0
    %2109 = vmatpush1.msra.mxu0 %v2062
    %2110 = vmatprep.subr.mxu0 0.0
    %2111 = vmatpush1.msra.mxu0 %v2061
    %2112 = vmatprep.subr.mxu0 0.0
    %2113 = vmatpush2.msra.mxu0 0.0
    %2114 = vmatprep.subr.mxu0 0.0
    %2115 = vmatpush2.msra.mxu0 0.0
    %2116 = vmatprep.subr.mxu0 0.0
    %2117 = vmatpush2.msra.mxu0 0.0
    %2118 = vmatprep.subr.mxu0 0.0
    %2119 = vmatpush2.msra.mxu0 0.0
    %2120 = vmatprep.subr.mxu0 0.0
    %2121 = vmatpush2.msra.mxu0 0.0
    %2122 = vmatprep.subr.mxu0 0.0
    %2123 = vmatpush2.msra.mxu0 0.0
    %2124 = vmatprep.subr.mxu0 0.0
    %2125 = vmatpush2.msra.mxu0 0.0
    %2126 = vmatprep.subr.mxu0 0.0
    %2127 = vmatpush2.msra.mxu0 0.0
    %2128 = vmatprep.subr.mxu0 0.0
    %2129 = vmatpush2.msra.mxu0 0.0
    %2130 = vmatprep.subr.mxu0 0.0
    %2131 = vmatpush2.msra.mxu0 0.0
    %2132 = vmatprep.subr.mxu0 0.0
    %2133 = vmatpush2.msra.mxu0 0.0
    %2134 = vmatprep.subr.mxu0 0.0
    %2135 = vmatpush2.msra.mxu0 0.0
    %2136 = vmatprep.subr.mxu0 0.0
    %2137 = vmatpush2.msra.mxu0 0.0
    %2138 = vmatprep.subr.mxu0 0.0
    %2139 = vmatpush2.msra.mxu0 0.0
    %2140 = vmatprep.subr.mxu0 0.0
    %2141 = vmatpush2.msra.mxu0 0.0
    %2142 = vmatprep.subr.mxu0 0.0
    %2143 = vmatpush2.msra.mxu0 0.0
    %2144 = vmatprep.mubr.f32.mxu0 0.0
    %2145 = vmatmul.mubr.f32.gmra.mxu0 %v2078
    %v2146 = vpop.f32.mrf.mxu0
    %v2147 = vadd.f32 %v2074, %v2146
    %v2148 = vpop.f32.mrf.mxu0
    %2149 = vdwg.mxu0
    %vm2150 = vcmask 9216
    %2151 = vst.msk [vmem:[#allocation6] sm:$0x3] %vm2150, %v2147
    // Predicated region
    $region54: #{tpu_custom_call.1} parent=1 // pred_check
      _
    $region55: #{tpu_custom_call.1} parent=1 // pred_check_branch
      %2153 = sbr.rel (0) target = $region57
    $region56: #{tpu_custom_call.1} parent=1 // pred_region
      %s2155 = ssub.s32 32, 32
      %2156 = vsyncadd [#allocation5], %s2155
      %s2158 = sshll.u32 [#allocation6], 4
      %s2159 = int_to_ptr.vmem [resolvable:$true] %s2158
      %2161 = dma.vmem_to_hbm [thread:$0]  %s2159, 32, %s12, [#allocation5]
    $region57: #{tpu_custom_call.1} parent=1 // pred_fallthru
      _
    // Predicated region
    $region58: #{tpu_custom_call.1} parent=1 // pred_check
      _
    $region59: #{tpu_custom_call.1} parent=1 // pred_check_branch
      %2163 = sbr.rel (0) target = $region61
    $region60: #{tpu_custom_call.1} parent=1 // pred_region
      %2164 = dma.done [#allocation5], 32
    $region61: #{tpu_custom_call.1} parent=1 // pred_fallthru
      _
    %2165 = vsyncpa [#allocation4], 1
    %2166 = vsyncpa [#allocation5], 1

</llo_original>
